<compile_context>
chip_gen: v7x
topology: tpu7x:2x2x1
jax: 0.10.0
libtpu: 0.0.40
codegen_flags: <defaults>
</compile_context>

<pallas_src>
import functools

import jax
import jax.numpy as jnp
from jax.experimental import pallas as pl
from jax.experimental.pallas import tpu as pltpu


def _code_vectorizer_kernel(
    s_ref, p_ref, e_ref,        # (TB*Cp, D) bf16 embedding streams
    ws_ref, wp_ref, we_ref,     # (D, D)     bf16 slices of the transform weight
    bt_ref,                     # (1, D)     f32 transform bias
    wa_ref,                     # (1, D)     f32 attention weight (row vector)
    o_ref,                      # (TB, D)    f32 aggregated context vectors
    *, tb, c_pad, c_valid,
):
    # Linear(3*dim, dim) without materializing the concat: three MXU matmuls
    # (bf16 operands, f32 accumulation), summed in f32.
    acc = jnp.dot(s_ref[...], ws_ref[...], preferred_element_type=jnp.float32)
    acc = acc + jnp.dot(p_ref[...], wp_ref[...],
                        preferred_element_type=jnp.float32)
    acc = acc + jnp.dot(e_ref[...], we_ref[...],
                        preferred_element_type=jnp.float32)
    h = jnp.tanh(acc + bt_ref[...])                       # (TB*Cp, D) f32

    d = h.shape[-1]
    h3 = h.reshape(tb, c_pad, d)                          # (TB, Cp, D)

    # Attention logits on the VPU (broadcast-mul) + lane reduce.  The
    # Linear(dim, 1) bias shifts every logit equally -> softmax-invariant.
    logits = jnp.sum(h3 * wa_ref[...], axis=-1)           # (TB, Cp) f32

    if c_pad != c_valid:  # mask padded contexts out of the softmax
        cidx = jax.lax.broadcasted_iota(jnp.int32, (tb, c_pad), 1)
        logits = jnp.where(cidx < c_valid, logits, -1e30)

    # softmax over the contexts (lane) axis
    m = jnp.max(logits, axis=-1, keepdims=True)
    p = jnp.exp(logits - m)
    denom = jnp.sum(p, axis=-1, keepdims=True)
    attn = p * pl.reciprocal(denom, approx=False)         # (TB, Cp) f32

    # Weighted aggregation on the MXU: (TB,1,Cp) @ (TB,Cp,D) -> (TB,1,D).
    out3 = jnp.einsum(
        "bqc,bcd->bqd",
        attn[:, None, :].astype(jnp.bfloat16),
        h3.astype(jnp.bfloat16),
        preferred_element_type=jnp.float32,
    )
    o_ref[...] = out3[:, 0, :]                            # lane-dense (TB, D)


def code_vectorizer_forward(starts, paths, ends, params, *, tb=8):
    """Embedding gathers in plain JAX; transform+attention fused in one kernel."""
    W = params["transform_w"]                  # (3*dim, dim), stored in x out
    dim = W.shape[1]
    ws = W[:dim].astype(jnp.bfloat16)
    wp = W[dim:2 * dim].astype(jnp.bfloat16)
    we = W[2 * dim:].astype(jnp.bfloat16)
    bt = params["transform_b"].reshape(1, dim).astype(jnp.float32)
    wa = params["attention_w"].reshape(1, dim).astype(jnp.float32)
    # params["attention_b"] shifts all logits equally -> no effect on softmax.

    tokens_embed = params["tokens_embed"].astype(jnp.bfloat16)
    paths_embed = params["paths_embed"].astype(jnp.bfloat16)
    s_emb = tokens_embed[starts]               # (B, C, dim) bf16
    p_emb = paths_embed[paths]
    e_emb = tokens_embed[ends]
    # Dropout(p=0.2): identity in eval mode.

    B, C = starts.shape
    tb = max(8, -(-int(tb) // 8) * 8)          # keep output blocks 8-row aligned
    c_pad = -(-C // 8) * 8                     # sublane-aligned context count
    b_pad = -(-B // tb) * tb
    if (b_pad, c_pad) != (B, C):
        pad = ((0, b_pad - B), (0, c_pad - C), (0, 0))
        s_emb = jnp.pad(s_emb, pad)
        p_emb = jnp.pad(p_emb, pad)
        e_emb = jnp.pad(e_emb, pad)

    rows = tb * c_pad
    s2 = s_emb.reshape(b_pad * c_pad, dim)
    p2 = p_emb.reshape(b_pad * c_pad, dim)
    e2 = e_emb.reshape(b_pad * c_pad, dim)

    # VMEM budget: double-buffered activation inputs + weights + output.  Only
    # raise the scoped limit when a large (TB, C) tile actually needs it; cap
    # below v7x's 64 MiB physical VMEM.
    est = (2 * 3 * rows * dim * 2            # s/p/e tiles, double-buffered bf16
           + 3 * dim * dim * 2               # weight slices
           + 2 * tb * dim * 4                # output tile, double-buffered
           + 4 * dim * 4)                    # biases / attention row
    vmem_limit = int(min(2 * est, 48 * 2**20)) if est > (16 * 2**20) else None

    out = pl.pallas_call(
        functools.partial(_code_vectorizer_kernel,
                          tb=tb, c_pad=c_pad, c_valid=C),
        out_shape=jax.ShapeDtypeStruct((b_pad, dim), jnp.float32),
        grid_spec=pltpu.PrefetchScalarGridSpec(
            num_scalar_prefetch=0,
            grid=(b_pad // tb,),
            in_specs=[
                pl.BlockSpec((rows, dim), lambda b: (b, 0)),   # starts emb
                pl.BlockSpec((rows, dim), lambda b: (b, 0)),   # paths emb
                pl.BlockSpec((rows, dim), lambda b: (b, 0)),   # ends emb
                pl.BlockSpec((dim, dim), lambda b: (0, 0)),    # Wt[:D]
                pl.BlockSpec((dim, dim), lambda b: (0, 0)),    # Wt[D:2D]
                pl.BlockSpec((dim, dim), lambda b: (0, 0)),    # Wt[2D:]
                pl.BlockSpec((1, dim), lambda b: (0, 0)),      # transform bias
                pl.BlockSpec((1, dim), lambda b: (0, 0)),      # attention weight
            ],
            out_specs=pl.BlockSpec((tb, dim), lambda b: (b, 0)),
        ),
        compiler_params=pltpu.CompilerParams(
            dimension_semantics=("parallel",),
            vmem_limit_bytes=vmem_limit,
        ),
    )(s2, p2, e2, ws, wp, we, bt, wa)

    return out[:B]                            # (B, dim), matches torch output


def _reference_forward(starts, paths, ends, params):
    """Pure-JAX f32 reference (exact PyTorch module semantics, eval mode)."""
    s = params["tokens_embed"][starts]
    p = params["paths_embed"][paths]
    e = params["tokens_embed"][ends]
    x = jnp.concatenate((s, p, e), axis=2)
    h = jnp.tanh(jnp.einsum("bcf,fd->bcd", x, params["transform_w"])
                 + params["transform_b"][0])
    logits = jnp.einsum("bcd,do->bco", h, params["attention_w"]) \
        + params["attention_b"][0]
    attn = jax.nn.softmax(logits, axis=1)
    return jnp.sum(h * attn, axis=1)


def _reference_forward_bf16(starts, paths, ends, params):
    """Reference mirroring the kernel's bf16-operand / f32-accum precision."""
    W = params["transform_w"]
    dim = W.shape[1]
    te = params["tokens_embed"].astype(jnp.bfloat16)
    pe = params["paths_embed"].astype(jnp.bfloat16)
    s, p, e = te[starts], pe[paths], te[ends]
    acc = (jnp.einsum("bcd,de->bce", s, W[:dim].astype(jnp.bfloat16),
                      preferred_element_type=jnp.float32)
           + jnp.einsum("bcd,de->bce", p, W[dim:2 * dim].astype(jnp.bfloat16),
                        preferred_element_type=jnp.float32)
           + jnp.einsum("bcd,de->bce", e, W[2 * dim:].astype(jnp.bfloat16),
                        preferred_element_type=jnp.float32)
           + params["transform_b"].reshape(1, 1, dim))
    h = jnp.tanh(acc)
    logits = jnp.sum(h * params["attention_w"].reshape(1, 1, dim), axis=-1)
    attn = jax.nn.softmax(logits, axis=-1)
    return jnp.einsum("bc,bcd->bd", attn.astype(jnp.bfloat16),
                      h.astype(jnp.bfloat16),
                      preferred_element_type=jnp.float32)


def init_params(key, n_tokens, n_paths, dim):
    ks = jax.random.split(key, 6)
    return {
        "tokens_embed": jax.random.normal(ks[0], (n_tokens, dim), jnp.float32),
        "paths_embed": jax.random.normal(ks[1], (n_paths, dim), jnp.float32),
        # nn.Linear(3*dim, dim): weight stored transposed to (in, out)
        "transform_w": jax.random.normal(ks[2], (3 * dim, dim), jnp.float32)
        * (1.0 / jnp.sqrt(3.0 * dim)),
        "transform_b": jax.random.normal(ks[3], (1, dim), jnp.float32) * 0.01,
        # nn.Linear(dim, 1): weight stored transposed to (in, out)
        "attention_w": jax.random.normal(ks[4], (dim, 1), jnp.float32)
        * (1.0 / jnp.sqrt(dim)),
        "attention_b": jax.random.normal(ks[5], (1, 1), jnp.float32) * 0.01,
    }


if __name__ == "__main__":
    n_tokens, n_paths, dim = 50, 40, 64
    B, C = 16, 16     # batch, path-contexts per sample (small demo sizes)

    params = init_params(jax.random.PRNGKey(0), n_tokens, n_paths, dim)
    k1, k2, k3 = jax.random.split(jax.random.PRNGKey(0), 3)
    starts = jax.random.randint(k1, (B, C), 0, n_tokens, dtype=jnp.int32)
    paths = jax.random.randint(k2, (B, C), 0, n_paths, dtype=jnp.int32)
    ends = jax.random.randint(k3, (B, C), 0, n_tokens, dtype=jnp.int32)

    out = jax.block_until_ready(
        code_vectorizer_forward(starts, paths, ends, params, tb=8))
    assert out.shape == (B, dim)

    # Strict check against a precision-matched (bf16-operand) reference.
    ref_bf16 = _reference_forward_bf16(starts, paths, ends, params)
    assert jnp.allclose(out, ref_bf16, atol=2e-3, rtol=2e-3)

    # Loose sanity check against the full-f32 module semantics (bf16 matmul
    # operands cost ~1e-2 absolute on O(1) outputs).
    ref_f32 = _reference_forward(starts, paths, ends, params)
    assert jnp.allclose(out, ref_f32, atol=5e-2, rtol=5e-2)

    print("KERNEL_OK")
</pallas_src>

<mosaic_0001>
module attributes {stable_mosaic.version = 11 : i64} {
  func.func @_code_vectorizer_kernel(%arg0: i32, %arg1: memref<128x64xbf16, #tpu.memory_space<vmem>>, %arg2: memref<128x64xbf16, #tpu.memory_space<vmem>>, %arg3: memref<128x64xbf16, #tpu.memory_space<vmem>>, %arg4: memref<64x64xbf16, #tpu.memory_space<vmem>>, %arg5: memref<64x64xbf16, #tpu.memory_space<vmem>>, %arg6: memref<64x64xbf16, #tpu.memory_space<vmem>>, %arg7: memref<1x64xf32, #tpu.memory_space<vmem>>, %arg8: memref<1x64xf32, #tpu.memory_space<vmem>>, %arg9: memref<8x64xf32, #tpu.memory_space<vmem>>) attributes {dimension_semantics = [#tpu.dimension_semantics<parallel>], iteration_bounds = array<i64: 2>, scalar_prefetch = 0 : i64, scratch_operands = 0 : i64, tpu.core_type = #tpu.core_type<tc>, window_params = [{transform_indices = @transform_0, window_bounds = array<i64: 128, 64>}, {transform_indices = @transform_1, window_bounds = array<i64: 128, 64>}, {transform_indices = @transform_2, window_bounds = array<i64: 128, 64>}, {pipeline_mode = #tpu.pipeline_mode<synchronous>, transform_indices = @transform_3, window_bounds = array<i64: 64, 64>}, {pipeline_mode = #tpu.pipeline_mode<synchronous>, transform_indices = @transform_4, window_bounds = array<i64: 64, 64>}, {pipeline_mode = #tpu.pipeline_mode<synchronous>, transform_indices = @transform_5, window_bounds = array<i64: 64, 64>}, {pipeline_mode = #tpu.pipeline_mode<synchronous>, transform_indices = @transform_6, window_bounds = array<i64: 1, 64>}, {pipeline_mode = #tpu.pipeline_mode<synchronous>, transform_indices = @transform_7, window_bounds = array<i64: 1, 64>}, {transform_indices = @transform_8, window_bounds = array<i64: 8, 64>}]} {
    %c0 = arith.constant 0 : index
    %c0_0 = arith.constant 0 : index
    %0 = vector.load %arg1[%c0, %c0_0] : memref<128x64xbf16, #tpu.memory_space<vmem>>, vector<128x64xbf16>
    %c0_1 = arith.constant 0 : index
    %c0_2 = arith.constant 0 : index
    %1 = vector.load %arg4[%c0_1, %c0_2] : memref<64x64xbf16, #tpu.memory_space<vmem>>, vector<64x64xbf16>
    %cst = arith.constant dense<0.000000e+00> : vector<128x64xf32>
    %2 = tpu.matmul %0, %1, %cst {dimension_numbers = #tpu.dot_dimension_numbers<[1], [0], [0], [1], [0, 0, 1, 1], [], []>} : vector<128x64xbf16>, vector<64x64xbf16>, vector<128x64xf32> -> vector<128x64xf32>
    %c0_3 = arith.constant 0 : index
    %c0_4 = arith.constant 0 : index
    %3 = vector.load %arg2[%c0_3, %c0_4] : memref<128x64xbf16, #tpu.memory_space<vmem>>, vector<128x64xbf16>
    %c0_5 = arith.constant 0 : index
    %c0_6 = arith.constant 0 : index
    %4 = vector.load %arg5[%c0_5, %c0_6] : memref<64x64xbf16, #tpu.memory_space<vmem>>, vector<64x64xbf16>
    %cst_7 = arith.constant dense<0.000000e+00> : vector<128x64xf32>
    %5 = tpu.matmul %3, %4, %cst_7 {dimension_numbers = #tpu.dot_dimension_numbers<[1], [0], [0], [1], [0, 0, 1, 1], [], []>} : vector<128x64xbf16>, vector<64x64xbf16>, vector<128x64xf32> -> vector<128x64xf32>
    %6 = arith.addf %2, %5 : vector<128x64xf32>
    %c0_8 = arith.constant 0 : index
    %c0_9 = arith.constant 0 : index
    %7 = vector.load %arg3[%c0_8, %c0_9] : memref<128x64xbf16, #tpu.memory_space<vmem>>, vector<128x64xbf16>
    %c0_10 = arith.constant 0 : index
    %c0_11 = arith.constant 0 : index
    %8 = vector.load %arg6[%c0_10, %c0_11] : memref<64x64xbf16, #tpu.memory_space<vmem>>, vector<64x64xbf16>
    %cst_12 = arith.constant dense<0.000000e+00> : vector<128x64xf32>
    %9 = tpu.matmul %7, %8, %cst_12 {dimension_numbers = #tpu.dot_dimension_numbers<[1], [0], [0], [1], [0, 0, 1, 1], [], []>} : vector<128x64xbf16>, vector<64x64xbf16>, vector<128x64xf32> -> vector<128x64xf32>
    %10 = arith.addf %6, %9 : vector<128x64xf32>
    %c0_13 = arith.constant 0 : index
    %c0_14 = arith.constant 0 : index
    %11 = vector.load %arg7[%c0_13, %c0_14] : memref<1x64xf32, #tpu.memory_space<vmem>>, vector<1x64xf32>
    %12 = vector.broadcast %11 : vector<1x64xf32> to vector<128x64xf32>
    %13 = arith.addf %10, %12 : vector<128x64xf32>
    %14 = math.tanh %13 : vector<128x64xf32>
    %15 = vector.shape_cast %14 : vector<128x64xf32> to vector<8x16x64xf32>
    %c0_15 = arith.constant 0 : index
    %c0_16 = arith.constant 0 : index
    %16 = vector.load %arg8[%c0_15, %c0_16] : memref<1x64xf32, #tpu.memory_space<vmem>>, vector<1x64xf32>
    %17 = vector.shape_cast %16 : vector<1x64xf32> to vector<1x1x64xf32>
    %18 = vector.broadcast %17 : vector<1x1x64xf32> to vector<8x16x64xf32>
    %19 = arith.mulf %15, %18 : vector<8x16x64xf32>
    %cst_17 = arith.constant dense<0.000000e+00> : vector<8x16xf32>
    %20 = vector.multi_reduction <add>, %19, %cst_17 [2] : vector<8x16x64xf32> to vector<8x16xf32>
    %cst_18 = arith.constant dense<0xFF800000> : vector<8xf32>
    %21 = vector.multi_reduction <maximumf>, %20, %cst_18 [1] : vector<8x16xf32> to vector<8xf32>
    %22 = vector.shape_cast %21 : vector<8xf32> to vector<8x1xf32>
    %23 = vector.broadcast %22 : vector<8x1xf32> to vector<8x16xf32>
    %24 = arith.subf %20, %23 : vector<8x16xf32>
    %25 = math.exp %24 : vector<8x16xf32>
    %cst_19 = arith.constant dense<0.000000e+00> : vector<8xf32>
    %26 = vector.multi_reduction <add>, %25, %cst_19 [1] : vector<8x16xf32> to vector<8xf32>
    %27 = vector.shape_cast %26 : vector<8xf32> to vector<8x1xf32>
    %28 = tpu.reciprocal %27 : vector<8x1xf32> -> vector<8x1xf32>
    %29 = vector.broadcast %28 : vector<8x1xf32> to vector<8x16xf32>
    %30 = arith.mulf %25, %29 : vector<8x16xf32>
    %31 = vector.shape_cast %30 : vector<8x16xf32> to vector<8x1x16xf32>
    %32 = arith.truncf %31 : vector<8x1x16xf32> to vector<8x1x16xbf16>
    %33 = arith.truncf %15 : vector<8x16x64xf32> to vector<8x16x64xbf16>
    "tpu.trace_start"() <{level = 10 : i32, message = "bqc,bcd->bqd"}> : () -> ()
    %cst_20 = arith.constant dense<0.000000e+00> : vector<8x1x64xf32>
    %34 = tpu.matmul %32, %33, %cst_20 {dimension_numbers = #tpu.dot_dimension_numbers<[2], [1], [1], [2], [0, 0, 0, 1, 1, 2], [0], [0]>} : vector<8x1x16xbf16>, vector<8x16x64xbf16>, vector<8x1x64xf32> -> vector<8x1x64xf32>
    "tpu.trace_stop"() : () -> ()
    %35 = vector.shape_cast %34 : vector<8x1x64xf32> to vector<8x64xf32>
    %c0_21 = arith.constant 0 : index
    %c0_22 = arith.constant 0 : index
    %36 = vector.load %arg9[%c0_21, %c0_22] : memref<8x64xf32, #tpu.memory_space<vmem>>, vector<8x64xf32>
    tpu.vector_store %arg9[%c0_21, %c0_22], %35 {strides = array<i32>} : memref<8x64xf32, #tpu.memory_space<vmem>>, vector<8x64xf32>,
    return
  }
  func.func @transform_0(%arg0: i32) -> (i32, i32) {
    %c0_i32 = arith.constant 0 : i32
    %c0_i32_0 = arith.constant 0 : i32
    return %arg0, %c0_i32 : i32, i32
  }
  func.func @transform_1(%arg0: i32) -> (i32, i32) {
    %c0_i32 = arith.constant 0 : i32
    %c0_i32_0 = arith.constant 0 : i32
    return %arg0, %c0_i32 : i32, i32
  }
  func.func @transform_2(%arg0: i32) -> (i32, i32) {
    %c0_i32 = arith.constant 0 : i32
    %c0_i32_0 = arith.constant 0 : i32
    return %arg0, %c0_i32 : i32, i32
  }
  func.func @transform_3(%arg0: i32) -> (i32, i32) {
    %c0_i32 = arith.constant 0 : i32
    %c0_i32_0 = arith.constant 0 : i32
    %c0_i32_1 = arith.constant 0 : i32
    return %c0_i32, %c0_i32_0 : i32, i32
  }
  func.func @transform_4(%arg0: i32) -> (i32, i32) {
    %c0_i32 = arith.constant 0 : i32
    %c0_i32_0 = arith.constant 0 : i32
    %c0_i32_1 = arith.constant 0 : i32
    return %c0_i32, %c0_i32_0 : i32, i32
  }
  func.func @transform_5(%arg0: i32) -> (i32, i32) {
    %c0_i32 = arith.constant 0 : i32
    %c0_i32_0 = arith.constant 0 : i32
    %c0_i32_1 = arith.constant 0 : i32
    return %c0_i32, %c0_i32_0 : i32, i32
  }
  func.func @transform_6(%arg0: i32) -> (i32, i32) {
    %c0_i32 = arith.constant 0 : i32
    %c0_i32_0 = arith.constant 0 : i32
    %c0_i32_1 = arith.constant 0 : i32
    return %c0_i32, %c0_i32_0 : i32, i32
  }
  func.func @transform_7(%arg0: i32) -> (i32, i32) {
    %c0_i32 = arith.constant 0 : i32
    %c0_i32_0 = arith.constant 0 : i32
    %c0_i32_1 = arith.constant 0 : i32
    return %c0_i32, %c0_i32_0 : i32, i32
  }
  func.func @transform_8(%arg0: i32) -> (i32, i32) {
    %c0_i32 = arith.constant 0 : i32
    %c0_i32_0 = arith.constant 0 : i32
    return %arg0, %c0_i32 : i32, i32
  }
}

</mosaic_0001>

<llo_original>
// kernel: tpu_custom_call.1
$region0: #{tpu_custom_call.1}
  #allocation0 [shape = 'u32[]', space=smem, size = 0x4, offset = 0x4, fixed_abs, tag = 'smem constant byte address 0x4 - core index']
  #allocation1 [shape = 'u32[144,128]{1,0:T(1,128)}', space=vmem, size = 0x12000, scoped, tag = 'internal scratch']
  %s0 = inlined_call_operand.vmem [shape: bf16[256,64], index: 0, kind: input, shape index: {}]
  %s1 = inlined_call_operand.vmem [shape: bf16[256,64], index: 1, kind: input, shape index: {}]
  %s2 = inlined_call_operand.vmem [shape: bf16[256,64], index: 2, kind: input, shape index: {}]
  %s3 = inlined_call_operand.vmem [shape: bf16[64,64], index: 3, kind: input, shape index: {}]
  %s4 = inlined_call_operand.vmem [shape: bf16[64,64], index: 4, kind: input, shape index: {}]
  %s5 = inlined_call_operand.vmem [shape: bf16[64,64], index: 5, kind: input, shape index: {}]
  %s6 = inlined_call_operand.vmem [shape: f32[1,64], index: 6, kind: input, shape index: {}]
  %s7 = inlined_call_operand.vmem [shape: f32[1,64], index: 7, kind: input, shape index: {}]
  %s8 = inlined_call_operand.hbm [shape: f32[16,64], index: 8, kind: output, shape index: {}]
  %s9 = sld [smem:[#allocation0]]
  $region65: #{tpu_custom_call.1} parent=0
    _
  %s11 = ssub.s32 1, %s9
  %s12 = scalar_select 0, %s11, %s9
  $region1: #{tpu_custom_call.1} parent=0
    #allocation2 [shape = 'u8[8192]{0}', space=vmem, size = 0x2000, scoped, tag = 'output window, operand 0']
    #allocation3 [shape = 's32[2]{0}', space=sflag, size = 0x8, scoped, tag = 'scoped memory for tpu_custom_call.1']
    %13 = vsyncpa [#allocation3], 0
    %s14 = scalar_lea.sflag [#allocation3], 1
    %15 = vsyncpa %s14, 0
    loop: start=0, step=1, limit=4
    $region2: #{tpu_custom_call.1} parent=1 // loop_pre_header
      _
    $region3: #{tpu_custom_call.1} parent=1 // loop_header
      %s17 = sphi 0, %s21
      %p18 = scmp.ge.s32.totalorder %s17, 4
      %s27 = sphi 0, %s29
      %s30 = sphi 0, %s27
      %s31 = sphi 0, %s30
      %s47 = sphi 0, %s31
      %s53 = sphi 0, %s55
      %s56 = sphi 0, %s53
      %s57 = sphi 0, %s56
      %s73 = sphi 0, %s57
      %s79 = sphi 0, %s81
      %s82 = sphi 0, %s79
      %s83 = sphi 0, %s82
      %s99 = sphi 0, %s83
      %s103 = sphi 0, %s103
      %s105 = sphi 0, %s103
      %s106 = sphi 0, %s105
      %s120 = sphi 0, %s106
      %s124 = sphi 0, %s124
      %s126 = sphi 0, %s124
      %s127 = sphi 0, %s126
      %s141 = sphi 0, %s127
      %s145 = sphi 0, %s145
      %s147 = sphi 0, %s145
      %s148 = sphi 0, %s147
      %s162 = sphi 0, %s148
      %s166 = sphi 0, %s166
      %s168 = sphi 0, %s166
      %s169 = sphi 0, %s168
      %s183 = sphi 0, %s169
      %s187 = sphi 0, %s187
      %s189 = sphi 0, %s187
      %s190 = sphi 0, %s189
      %s204 = sphi 0, %s190
      %s210 = sphi 0, %s212
      %s213 = sphi 0, %s210
      %s214 = sphi 0, %s213
      %s230 = sphi 0, %s214
    $region4: #{tpu_custom_call.1} parent=1 // loop_header_branch
      %20 = sbr.rel (%p18) target = $region8
    $region5: #{tpu_custom_call.1} parent=1 // loop_body
      %s22 = ssub.s32 %s17, 1
      %s23 = ssub.s32 %s17, 2
      %s24 = sadd.s32 %s17, 1
      %s25 = ssub.s32 %s17, %s24
      %p26 = scmp.eq.s32.totalorder %s25, 0
      %s28 = sadd.s32 %s27, 1
      %s29 = scalar_select %p26, %s27, %s28
      %p32 = pneg %p26
      %p33 = scmp.eq.s32.totalorder %s17, 1
      %p34 = por %p32, %p33
      %p35 = scmp.ne.s32.totalorder %s27, %s30
      %p36 = scmp.eq.s32.totalorder %s17, 0
      %p37 = por %p35, %p36
      %p38 = scmp.ne.s32.totalorder %s27, %s30
      %p39 = scmp.eq.s32.totalorder %s22, 1
      %p40 = por %p38, %p39
      %p41 = scmp.ne.s32.totalorder %s30, %s31
      %p42 = scmp.eq.s32.totalorder %s22, 0
      %p43 = por %p41, %p42
      %p44 = scmp.ne.s32.totalorder %s30, %s31
      %p45 = scmp.eq.s32.totalorder %s23, 1
      %p46 = por %p44, %p45
      %p48 = scmp.ne.s32.totalorder %s31, %s47
      %p49 = scmp.eq.s32.totalorder %s23, 0
      %p50 = por %p48, %p49
      %s51 = ssub.s32 %s17, %s24
      %p52 = scmp.eq.s32.totalorder %s51, 0
      %s54 = sadd.s32 %s53, 1
      %s55 = scalar_select %p52, %s53, %s54
      %p58 = pneg %p52
      %p59 = scmp.eq.s32.totalorder %s17, 1
      %p60 = por %p58, %p59
      %p61 = scmp.ne.s32.totalorder %s53, %s56
      %p62 = scmp.eq.s32.totalorder %s17, 0
      %p63 = por %p61, %p62
      %p64 = scmp.ne.s32.totalorder %s53, %s56
      %p65 = scmp.eq.s32.totalorder %s22, 1
      %p66 = por %p64, %p65
      %p67 = scmp.ne.s32.totalorder %s56, %s57
      %p68 = scmp.eq.s32.totalorder %s22, 0
      %p69 = por %p67, %p68
      %p70 = scmp.ne.s32.totalorder %s56, %s57
      %p71 = scmp.eq.s32.totalorder %s23, 1
      %p72 = por %p70, %p71
      %p74 = scmp.ne.s32.totalorder %s57, %s73
      %p75 = scmp.eq.s32.totalorder %s23, 0
      %p76 = por %p74, %p75
      %s77 = ssub.s32 %s17, %s24
      %p78 = scmp.eq.s32.totalorder %s77, 0
      %s80 = sadd.s32 %s79, 1
      %s81 = scalar_select %p78, %s79, %s80
      %p84 = pneg %p78
      %p85 = scmp.eq.s32.totalorder %s17, 1
      %p86 = por %p84, %p85
      %p87 = scmp.ne.s32.totalorder %s79, %s82
      %p88 = scmp.eq.s32.totalorder %s17, 0
      %p89 = por %p87, %p88
      %p90 = scmp.ne.s32.totalorder %s79, %s82
      %p91 = scmp.eq.s32.totalorder %s22, 1
      %p92 = por %p90, %p91
      %p93 = scmp.ne.s32.totalorder %s82, %s83
      %p94 = scmp.eq.s32.totalorder %s22, 0
      %p95 = por %p93, %p94
      %p96 = scmp.ne.s32.totalorder %s82, %s83
      %p97 = scmp.eq.s32.totalorder %s23, 1
      %p98 = por %p96, %p97
      %p100 = scmp.ne.s32.totalorder %s83, %s99
      %p101 = scmp.eq.s32.totalorder %s23, 0
      %p102 = por %p100, %p101
      %s104 = sadd.s32 %s103, 1
      %p107 = scmp.eq.s32.totalorder %s17, 1
      %p108 = scmp.ne.s32.totalorder %s103, %s105
      %p109 = scmp.eq.s32.totalorder %s17, 0
      %p110 = por %p108, %p109
      %p111 = scmp.ne.s32.totalorder %s103, %s105
      %p112 = scmp.eq.s32.totalorder %s22, 1
      %p113 = por %p111, %p112
      %p114 = scmp.ne.s32.totalorder %s105, %s106
      %p115 = scmp.eq.s32.totalorder %s22, 0
      %p116 = por %p114, %p115
      %p117 = scmp.ne.s32.totalorder %s105, %s106
      %p118 = scmp.eq.s32.totalorder %s23, 1
      %p119 = por %p117, %p118
      %p121 = scmp.ne.s32.totalorder %s106, %s120
      %p122 = scmp.eq.s32.totalorder %s23, 0
      %p123 = por %p121, %p122
      %s125 = sadd.s32 %s124, 1
      %p128 = scmp.eq.s32.totalorder %s17, 1
      %p129 = scmp.ne.s32.totalorder %s124, %s126
      %p130 = scmp.eq.s32.totalorder %s17, 0
      %p131 = por %p129, %p130
      %p132 = scmp.ne.s32.totalorder %s124, %s126
      %p133 = scmp.eq.s32.totalorder %s22, 1
      %p134 = por %p132, %p133
      %p135 = scmp.ne.s32.totalorder %s126, %s127
      %p136 = scmp.eq.s32.totalorder %s22, 0
      %p137 = por %p135, %p136
      %p138 = scmp.ne.s32.totalorder %s126, %s127
      %p139 = scmp.eq.s32.totalorder %s23, 1
      %p140 = por %p138, %p139
      %p142 = scmp.ne.s32.totalorder %s127, %s141
      %p143 = scmp.eq.s32.totalorder %s23, 0
      %p144 = por %p142, %p143
      %s146 = sadd.s32 %s145, 1
      %p149 = scmp.eq.s32.totalorder %s17, 1
      %p150 = scmp.ne.s32.totalorder %s145, %s147
      %p151 = scmp.eq.s32.totalorder %s17, 0
      %p152 = por %p150, %p151
      %p153 = scmp.ne.s32.totalorder %s145, %s147
      %p154 = scmp.eq.s32.totalorder %s22, 1
      %p155 = por %p153, %p154
      %p156 = scmp.ne.s32.totalorder %s147, %s148
      %p157 = scmp.eq.s32.totalorder %s22, 0
      %p158 = por %p156, %p157
      %p159 = scmp.ne.s32.totalorder %s147, %s148
      %p160 = scmp.eq.s32.totalorder %s23, 1
      %p161 = por %p159, %p160
      %p163 = scmp.ne.s32.totalorder %s148, %s162
      %p164 = scmp.eq.s32.totalorder %s23, 0
      %p165 = por %p163, %p164
      %s167 = sadd.s32 %s166, 1
      %p170 = scmp.eq.s32.totalorder %s17, 1
      %p171 = scmp.ne.s32.totalorder %s166, %s168
      %p172 = scmp.eq.s32.totalorder %s17, 0
      %p173 = por %p171, %p172
      %p174 = scmp.ne.s32.totalorder %s166, %s168
      %p175 = scmp.eq.s32.totalorder %s22, 1
      %p176 = por %p174, %p175
      %p177 = scmp.ne.s32.totalorder %s168, %s169
      %p178 = scmp.eq.s32.totalorder %s22, 0
      %p179 = por %p177, %p178
      %p180 = scmp.ne.s32.totalorder %s168, %s169
      %p181 = scmp.eq.s32.totalorder %s23, 1
      %p182 = por %p180, %p181
      %p184 = scmp.ne.s32.totalorder %s169, %s183
      %p185 = scmp.eq.s32.totalorder %s23, 0
      %p186 = por %p184, %p185
      %s188 = sadd.s32 %s187, 1
      %p191 = scmp.eq.s32.totalorder %s17, 1
      %p192 = scmp.ne.s32.totalorder %s187, %s189
      %p193 = scmp.eq.s32.totalorder %s17, 0
      %p194 = por %p192, %p193
      %p195 = scmp.ne.s32.totalorder %s187, %s189
      %p196 = scmp.eq.s32.totalorder %s22, 1
      %p197 = por %p195, %p196
      %p198 = scmp.ne.s32.totalorder %s189, %s190
      %p199 = scmp.eq.s32.totalorder %s22, 0
      %p200 = por %p198, %p199
      %p201 = scmp.ne.s32.totalorder %s189, %s190
      %p202 = scmp.eq.s32.totalorder %s23, 1
      %p203 = por %p201, %p202
      %p205 = scmp.ne.s32.totalorder %s190, %s204
      %p206 = scmp.eq.s32.totalorder %s23, 0
      %p207 = por %p205, %p206
      %s208 = ssub.s32 %s17, %s24
      %p209 = scmp.eq.s32.totalorder %s208, 0
      %s211 = sadd.s32 %s210, 1
      %s212 = scalar_select %p209, %s210, %s211
      %p215 = pneg %p209
      %p216 = scmp.eq.s32.totalorder %s17, 1
      %p217 = por %p215, %p216
      %p218 = scmp.ne.s32.totalorder %s210, %s213
      %p219 = scmp.eq.s32.totalorder %s17, 0
      %p220 = por %p218, %p219
      %p221 = scmp.ne.s32.totalorder %s210, %s213
      %p222 = scmp.eq.s32.totalorder %s22, 1
      %p223 = por %p221, %p222
      %p224 = scmp.ne.s32.totalorder %s213, %s214
      %p225 = scmp.eq.s32.totalorder %s22, 0
      %p226 = por %p224, %p225
      %p227 = scmp.ne.s32.totalorder %s213, %s214
      %p228 = scmp.eq.s32.totalorder %s23, 1
      %p229 = por %p227, %p228
      %p231 = scmp.ne.s32.totalorder %s214, %s230
      %p232 = scmp.eq.s32.totalorder %s23, 0
      %p233 = por %p231, %p232
      %p234 = scmp.le.s32.totalorder 1, %s17
      %p235 = scmp.lt.s32.totalorder %s17, 3
      %p236 = pnand %p234, %p235
      %p237 = pneg %p236
      // Predicated region
      $region9: #{tpu_custom_call.1} parent=5 // pred_check
        _
      $region10: #{tpu_custom_call.1} parent=5 // pred_check_branch
        %239 = sbr.rel (%p236) target = $region12
      $region11: #{tpu_custom_call.1} parent=5 // pred_region
        %s240 = ssub.s32 %s17, 1
        // Predicated region
        $region13: #{tpu_custom_call.1} parent=11 // pred_check
          %p241 = pneg %p116
        $region14: #{tpu_custom_call.1} parent=11 // pred_check_branch
          %243 = sbr.rel (%p241) target = $region16
        $region15: #{tpu_custom_call.1} parent=11 // pred_region
          _
        $region16: #{tpu_custom_call.1} parent=11 // pred_fallthru
          _
        // Predicated region
        $region17: #{tpu_custom_call.1} parent=11 // pred_check
          %p244 = pneg %p137
        $region18: #{tpu_custom_call.1} parent=11 // pred_check_branch
          %246 = sbr.rel (%p244) target = $region20
        $region19: #{tpu_custom_call.1} parent=11 // pred_region
          _
        $region20: #{tpu_custom_call.1} parent=11 // pred_fallthru
          _
        // Predicated region
        $region21: #{tpu_custom_call.1} parent=11 // pred_check
          %p247 = pneg %p158
        $region22: #{tpu_custom_call.1} parent=11 // pred_check_branch
          %249 = sbr.rel (%p247) target = $region24
        $region23: #{tpu_custom_call.1} parent=11 // pred_region
          _
        $region24: #{tpu_custom_call.1} parent=11 // pred_fallthru
          _
        // Predicated region
        $region25: #{tpu_custom_call.1} parent=11 // pred_check
          %p250 = pneg %p179
        $region26: #{tpu_custom_call.1} parent=11 // pred_check_branch
          %252 = sbr.rel (%p250) target = $region28
        $region27: #{tpu_custom_call.1} parent=11 // pred_region
          _
        $region28: #{tpu_custom_call.1} parent=11 // pred_fallthru
          _
        // Predicated region
        $region29: #{tpu_custom_call.1} parent=11 // pred_check
          %p253 = pneg %p200
        $region30: #{tpu_custom_call.1} parent=11 // pred_check_branch
          %255 = sbr.rel (%p253) target = $region32
        $region31: #{tpu_custom_call.1} parent=11 // pred_region
          _
        $region32: #{tpu_custom_call.1} parent=11 // pred_fallthru
          _
      $region12: #{tpu_custom_call.1} parent=5 // pred_fallthru
        _
      %p256 = scmp.lt.s32.totalorder %s17, 2
      // Predicated region
      $region33: #{tpu_custom_call.1} parent=5 // pred_check
        %p257 = pneg %p256
      $region34: #{tpu_custom_call.1} parent=5 // pred_check_branch
        %259 = sbr.rel (%p257) target = $region36
      $region35: #{tpu_custom_call.1} parent=5 // pred_region
        // Predicated region
        $region37: #{tpu_custom_call.1} parent=35 // pred_check
          %p260 = pneg %p37
        $region38: #{tpu_custom_call.1} parent=35 // pred_check_branch
          %262 = sbr.rel (%p260) target = $region40
        $region39: #{tpu_custom_call.1} parent=35 // pred_region
          %s263 = smul.u32 16, %s17
          %p264 = scmp.lt.s32.totalorder %s263, 31
          %s265 = scalar_select %p264, %s263, 31
          %s266 = smul.addr %s265, 4
          %s267 = scalar_lea.vmem %s0, %s266
          %s268 = smul.u32 16, %s17
        $region40: #{tpu_custom_call.1} parent=35 // pred_fallthru
          _
        // Predicated region
        $region41: #{tpu_custom_call.1} parent=35 // pred_check
          %p269 = pneg %p63
        $region42: #{tpu_custom_call.1} parent=35 // pred_check_branch
          %271 = sbr.rel (%p269) target = $region44
        $region43: #{tpu_custom_call.1} parent=35 // pred_region
          %s272 = smul.u32 16, %s17
          %p273 = scmp.lt.s32.totalorder %s272, 31
          %s274 = scalar_select %p273, %s272, 31
          %s275 = smul.addr %s274, 4
          %s276 = scalar_lea.vmem %s1, %s275
          %s277 = smul.u32 16, %s17
        $region44: #{tpu_custom_call.1} parent=35 // pred_fallthru
          _
        // Predicated region
        $region45: #{tpu_custom_call.1} parent=35 // pred_check
          %p278 = pneg %p89
        $region46: #{tpu_custom_call.1} parent=35 // pred_check_branch
          %280 = sbr.rel (%p278) target = $region48
        $region47: #{tpu_custom_call.1} parent=35 // pred_region
          %s281 = smul.u32 16, %s17
          %p282 = scmp.lt.s32.totalorder %s281, 31
          %s283 = scalar_select %p282, %s281, 31
          %s284 = smul.addr %s283, 4
          %s285 = scalar_lea.vmem %s2, %s284
          %s286 = smul.u32 16, %s17
        $region48: #{tpu_custom_call.1} parent=35 // pred_fallthru
          _
      $region36: #{tpu_custom_call.1} parent=5 // pred_fallthru
        _
      %p287 = scmp.le.s32.totalorder 1, %s17
      %p288 = scmp.lt.s32.totalorder %s17, 3
      %p289 = pnand %p287, %p288
      %p290 = pneg %p289
      // Predicated region
      $region49: #{tpu_custom_call.1} parent=5 // pred_check
        _
      $region50: #{tpu_custom_call.1} parent=5 // pred_check_branch
        %292 = sbr.rel (%p289) target = $region52
      $region51: #{tpu_custom_call.1} parent=5 // pred_region
        %s293 = ssub.s32 %s17, 1
        %s294 = smul.u32 16, %s22
        %p295 = scmp.lt.s32.totalorder %s294, 31
        %s296 = scalar_select %p295, %s294, 31
        %s297 = smul.addr %s296, 4
        %s298 = scalar_lea.vmem %s0, %s297
        %p299 = pneg %p43
        %p300 = pneg %p40
        %s301 = smul.u32 16, %s22
        %p302 = scmp.lt.s32.totalorder %s301, 31
        %s303 = scalar_select %p302, %s301, 31
        %s304 = smul.addr %s303, 4
        %s305 = scalar_lea.vmem %s1, %s304
        %p306 = pneg %p69
        %p307 = pneg %p66
        %s308 = smul.u32 16, %s22
        %p309 = scmp.lt.s32.totalorder %s308, 31
        %s310 = scalar_select %p309, %s308, 31
        %s311 = smul.addr %s310, 4
        %s312 = scalar_lea.vmem %s2, %s311
        %p313 = pneg %p95
        %p314 = pneg %p92
        %p315 = pneg %p116
        %p316 = pneg %p113
        %p317 = pneg %p137
        %p318 = pneg %p134
        %p319 = pneg %p158
        %p320 = pneg %p155
        %p321 = pneg %p179
        %p322 = pneg %p176
        %p323 = pneg %p200
        %p324 = pneg %p197
        %p325 = pneg %p226
        %p326 = pneg %p223
        %s327 = sand.u32 %s213, 1
        %s328 = scalar_lea.sflag [#allocation3], %s327
        %s329 = sand.u32 %s213, 1
        %s330 = smul.addr %s329, 8
        %s331 = scalar_lea.vmem [#allocation2], %s330
        %s332 = smul.u32 16, %s22
        %p333 = scmp.lt.s32.totalorder %s332, 31
        %s334 = scalar_select %p333, %s332, 31
        %s335 = smul.addr %s334, 4
        %s336 = scalar_lea.vmem %s0, %s335
        %s337 = smul.u32 16, %s22
        %s338 = smul.u32 16, %s22
        %p339 = scmp.lt.s32.totalorder %s338, 31
        %s340 = scalar_select %p339, %s338, 31
        %s341 = smul.addr %s340, 4
        %s342 = scalar_lea.vmem %s1, %s341
        %s343 = smul.u32 16, %s22
        %s344 = smul.u32 16, %s22
        %p345 = scmp.lt.s32.totalorder %s344, 31
        %s346 = scalar_select %p345, %s344, 31
        %s347 = smul.addr %s346, 4
        %s348 = scalar_lea.vmem %s2, %s347
        %s349 = smul.u32 16, %s22
        %v351 = vld [vmem:[%s336] sm:$0xf]
        %v352 = vld [vmem:[%s336 + $0x4] sm:$0xf]
        %v353 = vld [vmem:[%s336 + $0x8] sm:$0xf]
        %v354 = vld [vmem:[%s336 + $0xc] sm:$0xf]
        %v355 = vld [vmem:[%s336 + $0x10] sm:$0xf]
        %v356 = vld [vmem:[%s336 + $0x14] sm:$0xf]
        %v357 = vld [vmem:[%s336 + $0x18] sm:$0xf]
        %v358 = vld [vmem:[%s336 + $0x1c] sm:$0xf]
        %v359 = vld [vmem:[%s336 + $0x20] sm:$0xf]
        %v360 = vld [vmem:[%s336 + $0x24] sm:$0xf]
        %v361 = vld [vmem:[%s336 + $0x28] sm:$0xf]
        %v362 = vld [vmem:[%s336 + $0x2c] sm:$0xf]
        %v363 = vld [vmem:[%s336 + $0x30] sm:$0xf]
        %v364 = vld [vmem:[%s336 + $0x34] sm:$0xf]
        %v365 = vld [vmem:[%s336 + $0x38] sm:$0xf]
        %v366 = vld [vmem:[%s336 + $0x3c] sm:$0xf]
        %v367 = vld [vmem:[%s3] sm:$0xf]
        %v368 = vld [vmem:[%s3 + $0x4] sm:$0xf]
        %v369 = vld [vmem:[%s3 + $0x8] sm:$0xf]
        %v370 = vld [vmem:[%s3 + $0xc] sm:$0xf]
        %v371 = vld [vmem:[%s3 + $0x10] sm:$0xf]
        %v372 = vld [vmem:[%s3 + $0x14] sm:$0xf]
        %v373 = vld [vmem:[%s3 + $0x18] sm:$0xf]
        %v374 = vld [vmem:[%s3 + $0x1c] sm:$0xf]
        %v375 = vld [vmem:[%s342] sm:$0xf]
        %v376 = vld [vmem:[%s342 + $0x4] sm:$0xf]
        %v377 = vld [vmem:[%s342 + $0x8] sm:$0xf]
        %v378 = vld [vmem:[%s342 + $0xc] sm:$0xf]
        %v379 = vld [vmem:[%s342 + $0x10] sm:$0xf]
        %v380 = vld [vmem:[%s342 + $0x14] sm:$0xf]
        %v381 = vld [vmem:[%s342 + $0x18] sm:$0xf]
        %v382 = vld [vmem:[%s342 + $0x1c] sm:$0xf]
        %v383 = vld [vmem:[%s342 + $0x20] sm:$0xf]
        %v384 = vld [vmem:[%s342 + $0x24] sm:$0xf]
        %v385 = vld [vmem:[%s342 + $0x28] sm:$0xf]
        %v386 = vld [vmem:[%s342 + $0x2c] sm:$0xf]
        %v387 = vld [vmem:[%s342 + $0x30] sm:$0xf]
        %v388 = vld [vmem:[%s342 + $0x34] sm:$0xf]
        %v389 = vld [vmem:[%s342 + $0x38] sm:$0xf]
        %v390 = vld [vmem:[%s342 + $0x3c] sm:$0xf]
        %v391 = vld [vmem:[%s4] sm:$0xf]
        %v392 = vld [vmem:[%s4 + $0x4] sm:$0xf]
        %v393 = vld [vmem:[%s4 + $0x8] sm:$0xf]
        %v394 = vld [vmem:[%s4 + $0xc] sm:$0xf]
        %v395 = vld [vmem:[%s4 + $0x10] sm:$0xf]
        %v396 = vld [vmem:[%s4 + $0x14] sm:$0xf]
        %v397 = vld [vmem:[%s4 + $0x18] sm:$0xf]
        %v398 = vld [vmem:[%s4 + $0x1c] sm:$0xf]
        %v415 = vunpack.c.l.b16 %v375
        %v416 = vunpack.c.l.b16 %v376
        %v417 = vunpack.c.l.b16 %v377
        %v418 = vunpack.c.l.b16 %v378
        %v419 = vunpack.c.l.b16 %v379
        %v420 = vunpack.c.l.b16 %v380
        %v421 = vunpack.c.l.b16 %v381
        %v422 = vunpack.c.l.b16 %v382
        %v423 = vunpack.c.l.b16 %v383
        %v424 = vunpack.c.l.b16 %v384
        %v425 = vunpack.c.l.b16 %v385
        %v426 = vunpack.c.l.b16 %v386
        %v427 = vunpack.c.l.b16 %v387
        %v428 = vunpack.c.l.b16 %v388
        %v429 = vunpack.c.l.b16 %v389
        %v430 = vunpack.c.l.b16 %v390
        %v431 = vpack.c.b16 %v416, %v415
        %v432 = vpack.c.b16 %v418, %v417
        %v433 = vpack.c.b16 %v420, %v419
        %v434 = vpack.c.b16 %v422, %v421
        %v435 = vpack.c.b16 %v424, %v423
        %v436 = vpack.c.b16 %v426, %v425
        %v437 = vpack.c.b16 %v428, %v427
        %v438 = vpack.c.b16 %v430, %v429
        %v447 = vunpack.c.l.b16 %v391
        %v448 = vunpack.c.l.b16 %v392
        %v449 = vunpack.c.l.b16 %v393
        %v450 = vunpack.c.l.b16 %v394
        %v451 = vunpack.c.l.b16 %v395
        %v452 = vunpack.c.l.b16 %v396
        %v453 = vunpack.c.l.b16 %v397
        %v454 = vunpack.c.l.b16 %v398
        %v455 = vpack.c.b16 %v448, %v447
        %v456 = vpack.c.b16 %v450, %v449
        %v457 = vpack.c.b16 %v452, %v451
        %v458 = vpack.c.b16 %v454, %v453
        %vm463 = vcmask 523264
        %v465 = vsel %vm463, %v431, 0
        %v468 = vsel %vm463, %v432, 0
        %v471 = vsel %vm463, %v433, 0
        %v474 = vsel %vm463, %v434, 0
        %v477 = vsel %vm463, %v435, 0
        %v480 = vsel %vm463, %v436, 0
        %v483 = vsel %vm463, %v437, 0
        %v486 = vsel %vm463, %v438, 0
        %488 = vmatprep.subr.bf16.mxu0 0
        %489 = vmatpush1.bf16.msra.mxu0 %v455
        %490 = vmatprep.subr.bf16.mxu0 0
        %491 = vmatpush1.bf16.msra.mxu0 %v456
        %492 = vmatprep.subr.bf16.mxu0 0
        %493 = vmatpush1.bf16.msra.mxu0 %v457
        %494 = vmatprep.subr.bf16.mxu0 0
        %495 = vmatpush1.bf16.msra.mxu0 %v458
        %496 = vmatprep.subr.bf16.mxu0 0
        %497 = vmatpush1.bf16.msra.mxu0 0
        %498 = vmatprep.subr.bf16.mxu0 0
        %499 = vmatpush1.bf16.msra.mxu0 0
        %500 = vmatprep.subr.bf16.mxu0 0
        %501 = vmatpush1.bf16.msra.mxu0 0
        %502 = vmatprep.subr.bf16.mxu0 0
        %503 = vmatpush1.bf16.msra.mxu0 0
        %504 = vmatprep.subr.bf16.mxu0 0
        %505 = vmatpush1.bf16.msra.mxu0 0
        %506 = vmatprep.subr.bf16.mxu0 0
        %507 = vmatpush1.bf16.msra.mxu0 0
        %508 = vmatprep.subr.bf16.mxu0 0
        %509 = vmatpush1.bf16.msra.mxu0 0
        %510 = vmatprep.subr.bf16.mxu0 0
        %511 = vmatpush1.bf16.msra.mxu0 0
        %512 = vmatprep.subr.bf16.mxu0 0
        %513 = vmatpush1.bf16.msra.mxu0 0
        %514 = vmatprep.subr.bf16.mxu0 0
        %515 = vmatpush1.bf16.msra.mxu0 0
        %516 = vmatprep.subr.bf16.mxu0 0
        %517 = vmatpush1.bf16.msra.mxu0 0
        %518 = vmatprep.subr.bf16.mxu0 0
        %519 = vmatpush1.bf16.msra.mxu0 0
        %520 = vmatprep.mubr.bf16.mxu0 0
        %521 = vmatmul.mubr.bf16.gmra.mrb[0].mxu0 %v465
        %v522 = vpop.f32.mrb[0].mxu0
        %v523 = vadd.f32 0.0, %v522
        %v524 = vpop.f32.mrb[0].mxu0
        %v525 = vpop.f32.mrb[0].mxu0
        %v526 = vadd.f32 0.0, %v525
        %v527 = vpop.f32.mrb[0].mxu0
        %528 = vmatprep.mubr.bf16.mxu0 0
        %529 = vmatmul.mubr.bf16.gmra.mrb[0].mxu0 %v468
        %v530 = vpop.f32.mrb[0].mxu0
        %v531 = vadd.f32 0.0, %v530
        %v532 = vpop.f32.mrb[0].mxu0
        %v533 = vpop.f32.mrb[0].mxu0
        %v534 = vadd.f32 0.0, %v533
        %v535 = vpop.f32.mrb[0].mxu0
        %536 = vmatprep.mubr.bf16.mxu0 0
        %537 = vmatmul.mubr.bf16.gmra.mrb[0].mxu0 %v471
        %v538 = vpop.f32.mrb[0].mxu0
        %v539 = vadd.f32 0.0, %v538
        %v540 = vpop.f32.mrb[0].mxu0
        %v541 = vpop.f32.mrb[0].mxu0
        %v542 = vadd.f32 0.0, %v541
        %v543 = vpop.f32.mrb[0].mxu0
        %544 = vmatprep.mubr.bf16.mxu0 0
        %545 = vmatmul.mubr.bf16.gmra.mrb[0].mxu0 %v474
        %v546 = vpop.f32.mrb[0].mxu0
        %v547 = vadd.f32 0.0, %v546
        %v548 = vpop.f32.mrb[0].mxu0
        %v549 = vpop.f32.mrb[0].mxu0
        %v550 = vadd.f32 0.0, %v549
        %v551 = vpop.f32.mrb[0].mxu0
        %552 = vmatprep.mubr.bf16.mxu0 0
        %553 = vmatmul.mubr.bf16.gmra.mrb[0].mxu0 %v477
        %v554 = vpop.f32.mrb[0].mxu0
        %v555 = vadd.f32 0.0, %v554
        %v556 = vpop.f32.mrb[0].mxu0
        %v557 = vpop.f32.mrb[0].mxu0
        %v558 = vadd.f32 0.0, %v557
        %v559 = vpop.f32.mrb[0].mxu0
        %560 = vmatprep.mubr.bf16.mxu0 0
        %561 = vmatmul.mubr.bf16.gmra.mrb[0].mxu0 %v480
        %v562 = vpop.f32.mrb[0].mxu0
        %v563 = vadd.f32 0.0, %v562
        %v564 = vpop.f32.mrb[0].mxu0
        %v565 = vpop.f32.mrb[0].mxu0
        %v566 = vadd.f32 0.0, %v565
        %v567 = vpop.f32.mrb[0].mxu0
        %568 = vmatprep.mubr.bf16.mxu0 0
        %569 = vmatmul.mubr.bf16.gmra.mrb[0].mxu0 %v483
        %v570 = vpop.f32.mrb[0].mxu0
        %v571 = vadd.f32 0.0, %v570
        %v572 = vpop.f32.mrb[0].mxu0
        %v573 = vpop.f32.mrb[0].mxu0
        %v574 = vadd.f32 0.0, %v573
        %v575 = vpop.f32.mrb[0].mxu0
        %576 = vmatprep.mubr.bf16.mxu0 0
        %577 = vmatmul.mubr.bf16.gmra.mrb[0].mxu0 %v486
        %v578 = vpop.f32.mrb[0].mxu0
        %v579 = vadd.f32 0.0, %v578
        %v580 = vpop.f32.mrb[0].mxu0
        %v581 = vpop.f32.mrb[0].mxu0
        %v582 = vadd.f32 0.0, %v581
        %v583 = vpop.f32.mrb[0].mxu0
        %584 = vdwg.mxu0
        %v601 = vunpack.c.l.b16 %v351
        %v602 = vunpack.c.l.b16 %v352
        %v603 = vunpack.c.l.b16 %v353
        %v604 = vunpack.c.l.b16 %v354
        %v605 = vunpack.c.l.b16 %v355
        %v606 = vunpack.c.l.b16 %v356
        %v607 = vunpack.c.l.b16 %v357
        %v608 = vunpack.c.l.b16 %v358
        %v609 = vunpack.c.l.b16 %v359
        %v610 = vunpack.c.l.b16 %v360
        %v611 = vunpack.c.l.b16 %v361
        %v612 = vunpack.c.l.b16 %v362
        %v613 = vunpack.c.l.b16 %v363
        %v614 = vunpack.c.l.b16 %v364
        %v615 = vunpack.c.l.b16 %v365
        %v616 = vunpack.c.l.b16 %v366
        %v617 = vpack.c.b16 %v602, %v601
        %v618 = vpack.c.b16 %v604, %v603
        %v619 = vpack.c.b16 %v606, %v605
        %v620 = vpack.c.b16 %v608, %v607
        %v621 = vpack.c.b16 %v610, %v609
        %v622 = vpack.c.b16 %v612, %v611
        %v623 = vpack.c.b16 %v614, %v613
        %v624 = vpack.c.b16 %v616, %v615
        %v633 = vunpack.c.l.b16 %v367
        %v634 = vunpack.c.l.b16 %v368
        %v635 = vunpack.c.l.b16 %v369
        %v636 = vunpack.c.l.b16 %v370
        %v637 = vunpack.c.l.b16 %v371
        %v638 = vunpack.c.l.b16 %v372
        %v639 = vunpack.c.l.b16 %v373
        %v640 = vunpack.c.l.b16 %v374
        %v641 = vpack.c.b16 %v634, %v633
        %v642 = vpack.c.b16 %v636, %v635
        %v643 = vpack.c.b16 %v638, %v637
        %v644 = vpack.c.b16 %v640, %v639
        %v650 = vsel %vm463, %v617, 0
        %v653 = vsel %vm463, %v618, 0
        %v656 = vsel %vm463, %v619, 0
        %v659 = vsel %vm463, %v620, 0
        %v662 = vsel %vm463, %v621, 0
        %v665 = vsel %vm463, %v622, 0
        %v668 = vsel %vm463, %v623, 0
        %v671 = vsel %vm463, %v624, 0
        %673 = vmatprep.subr.bf16.mxu0 0
        %674 = vmatpush1.bf16.msra.mxu0 %v641
        %675 = vmatprep.subr.bf16.mxu0 0
        %676 = vmatpush1.bf16.msra.mxu0 %v642
        %677 = vmatprep.subr.bf16.mxu0 0
        %678 = vmatpush1.bf16.msra.mxu0 %v643
        %679 = vmatprep.subr.bf16.mxu0 0
        %680 = vmatpush1.bf16.msra.mxu0 %v644
        %681 = vmatprep.subr.bf16.mxu0 0
        %682 = vmatpush1.bf16.msra.mxu0 0
        %683 = vmatprep.subr.bf16.mxu0 0
        %684 = vmatpush1.bf16.msra.mxu0 0
        %685 = vmatprep.subr.bf16.mxu0 0
        %686 = vmatpush1.bf16.msra.mxu0 0
        %687 = vmatprep.subr.bf16.mxu0 0
        %688 = vmatpush1.bf16.msra.mxu0 0
        %689 = vmatprep.subr.bf16.mxu0 0
        %690 = vmatpush1.bf16.msra.mxu0 0
        %691 = vmatprep.subr.bf16.mxu0 0
        %692 = vmatpush1.bf16.msra.mxu0 0
        %693 = vmatprep.subr.bf16.mxu0 0
        %694 = vmatpush1.bf16.msra.mxu0 0
        %695 = vmatprep.subr.bf16.mxu0 0
        %696 = vmatpush1.bf16.msra.mxu0 0
        %697 = vmatprep.subr.bf16.mxu0 0
        %698 = vmatpush1.bf16.msra.mxu0 0
        %699 = vmatprep.subr.bf16.mxu0 0
        %700 = vmatpush1.bf16.msra.mxu0 0
        %701 = vmatprep.subr.bf16.mxu0 0
        %702 = vmatpush1.bf16.msra.mxu0 0
        %703 = vmatprep.subr.bf16.mxu0 0
        %704 = vmatpush1.bf16.msra.mxu0 0
        %705 = vmatprep.mubr.bf16.mxu0 0
        %706 = vmatmul.mubr.bf16.gmra.mrb[0].mxu0 %v650
        %v707 = vpop.f32.mrb[0].mxu0
        %v708 = vadd.f32 %v523, %v707
        %v709 = vpop.f32.mrb[0].mxu0
        %v710 = vpop.f32.mrb[0].mxu0
        %v711 = vadd.f32 %v526, %v710
        %v712 = vpop.f32.mrb[0].mxu0
        %713 = vmatprep.mubr.bf16.mxu0 0
        %714 = vmatmul.mubr.bf16.gmra.mrb[0].mxu0 %v653
        %v715 = vpop.f32.mrb[0].mxu0
        %v716 = vadd.f32 %v531, %v715
        %v717 = vpop.f32.mrb[0].mxu0
        %v718 = vpop.f32.mrb[0].mxu0
        %v719 = vadd.f32 %v534, %v718
        %v720 = vpop.f32.mrb[0].mxu0
        %721 = vmatprep.mubr.bf16.mxu0 0
        %722 = vmatmul.mubr.bf16.gmra.mrb[0].mxu0 %v656
        %v723 = vpop.f32.mrb[0].mxu0
        %v724 = vadd.f32 %v539, %v723
        %v725 = vpop.f32.mrb[0].mxu0
        %v726 = vpop.f32.mrb[0].mxu0
        %v727 = vadd.f32 %v542, %v726
        %v728 = vpop.f32.mrb[0].mxu0
        %729 = vmatprep.mubr.bf16.mxu0 0
        %730 = vmatmul.mubr.bf16.gmra.mrb[0].mxu0 %v659
        %v731 = vpop.f32.mrb[0].mxu0
        %v732 = vadd.f32 %v547, %v731
        %v733 = vpop.f32.mrb[0].mxu0
        %v734 = vpop.f32.mrb[0].mxu0
        %v735 = vadd.f32 %v550, %v734
        %v736 = vpop.f32.mrb[0].mxu0
        %737 = vmatprep.mubr.bf16.mxu0 0
        %738 = vmatmul.mubr.bf16.gmra.mrb[0].mxu0 %v662
        %v739 = vpop.f32.mrb[0].mxu0
        %v740 = vadd.f32 %v555, %v739
        %v741 = vpop.f32.mrb[0].mxu0
        %v742 = vpop.f32.mrb[0].mxu0
        %v743 = vadd.f32 %v558, %v742
        %v744 = vpop.f32.mrb[0].mxu0
        %745 = vmatprep.mubr.bf16.mxu0 0
        %746 = vmatmul.mubr.bf16.gmra.mrb[0].mxu0 %v665
        %v747 = vpop.f32.mrb[0].mxu0
        %v748 = vadd.f32 %v563, %v747
        %v749 = vpop.f32.mrb[0].mxu0
        %v750 = vpop.f32.mrb[0].mxu0
        %v751 = vadd.f32 %v566, %v750
        %v752 = vpop.f32.mrb[0].mxu0
        %753 = vmatprep.mubr.bf16.mxu0 0
        %754 = vmatmul.mubr.bf16.gmra.mrb[0].mxu0 %v668
        %v755 = vpop.f32.mrb[0].mxu0
        %v756 = vadd.f32 %v571, %v755
        %v757 = vpop.f32.mrb[0].mxu0
        %v758 = vpop.f32.mrb[0].mxu0
        %v759 = vadd.f32 %v574, %v758
        %v760 = vpop.f32.mrb[0].mxu0
        %761 = vmatprep.mubr.bf16.mxu0 0
        %762 = vmatmul.mubr.bf16.gmra.mrb[0].mxu0 %v671
        %v763 = vpop.f32.mrb[0].mxu0
        %v764 = vadd.f32 %v579, %v763
        %v765 = vpop.f32.mrb[0].mxu0
        %v766 = vpop.f32.mrb[0].mxu0
        %v767 = vadd.f32 %v582, %v766
        %v768 = vpop.f32.mrb[0].mxu0
        %769 = vdwg.mxu0
        %v770 = vld [vmem:[%s348] sm:$0xf]
        %v771 = vld [vmem:[%s348 + $0x4] sm:$0xf]
        %v772 = vld [vmem:[%s348 + $0x8] sm:$0xf]
        %v773 = vld [vmem:[%s348 + $0xc] sm:$0xf]
        %v774 = vld [vmem:[%s348 + $0x10] sm:$0xf]
        %v775 = vld [vmem:[%s348 + $0x14] sm:$0xf]
        %v776 = vld [vmem:[%s348 + $0x18] sm:$0xf]
        %v777 = vld [vmem:[%s348 + $0x1c] sm:$0xf]
        %v778 = vld [vmem:[%s348 + $0x20] sm:$0xf]
        %v779 = vld [vmem:[%s348 + $0x24] sm:$0xf]
        %v780 = vld [vmem:[%s348 + $0x28] sm:$0xf]
        %v781 = vld [vmem:[%s348 + $0x2c] sm:$0xf]
        %v782 = vld [vmem:[%s348 + $0x30] sm:$0xf]
        %v783 = vld [vmem:[%s348 + $0x34] sm:$0xf]
        %v784 = vld [vmem:[%s348 + $0x38] sm:$0xf]
        %v785 = vld [vmem:[%s348 + $0x3c] sm:$0xf]
        %v786 = vld [vmem:[%s5] sm:$0xf]
        %v787 = vld [vmem:[%s5 + $0x4] sm:$0xf]
        %v788 = vld [vmem:[%s5 + $0x8] sm:$0xf]
        %v789 = vld [vmem:[%s5 + $0xc] sm:$0xf]
        %v790 = vld [vmem:[%s5 + $0x10] sm:$0xf]
        %v791 = vld [vmem:[%s5 + $0x14] sm:$0xf]
        %v792 = vld [vmem:[%s5 + $0x18] sm:$0xf]
        %v793 = vld [vmem:[%s5 + $0x1c] sm:$0xf]
        %v810 = vunpack.c.l.b16 %v770
        %v811 = vunpack.c.l.b16 %v771
        %v812 = vunpack.c.l.b16 %v772
        %v813 = vunpack.c.l.b16 %v773
        %v814 = vunpack.c.l.b16 %v774
        %v815 = vunpack.c.l.b16 %v775
        %v816 = vunpack.c.l.b16 %v776
        %v817 = vunpack.c.l.b16 %v777
        %v818 = vunpack.c.l.b16 %v778
        %v819 = vunpack.c.l.b16 %v779
        %v820 = vunpack.c.l.b16 %v780
        %v821 = vunpack.c.l.b16 %v781
        %v822 = vunpack.c.l.b16 %v782
        %v823 = vunpack.c.l.b16 %v783
        %v824 = vunpack.c.l.b16 %v784
        %v825 = vunpack.c.l.b16 %v785
        %v826 = vpack.c.b16 %v811, %v810
        %v827 = vpack.c.b16 %v813, %v812
        %v828 = vpack.c.b16 %v815, %v814
        %v829 = vpack.c.b16 %v817, %v816
        %v830 = vpack.c.b16 %v819, %v818
        %v831 = vpack.c.b16 %v821, %v820
        %v832 = vpack.c.b16 %v823, %v822
        %v833 = vpack.c.b16 %v825, %v824
        %v842 = vunpack.c.l.b16 %v786
        %v843 = vunpack.c.l.b16 %v787
        %v844 = vunpack.c.l.b16 %v788
        %v845 = vunpack.c.l.b16 %v789
        %v846 = vunpack.c.l.b16 %v790
        %v847 = vunpack.c.l.b16 %v791
        %v848 = vunpack.c.l.b16 %v792
        %v849 = vunpack.c.l.b16 %v793
        %v850 = vpack.c.b16 %v843, %v842
        %v851 = vpack.c.b16 %v845, %v844
        %v852 = vpack.c.b16 %v847, %v846
        %v853 = vpack.c.b16 %v849, %v848
        %v859 = vsel %vm463, %v826, 0
        %v862 = vsel %vm463, %v827, 0
        %v865 = vsel %vm463, %v828, 0
        %v868 = vsel %vm463, %v829, 0
        %v871 = vsel %vm463, %v830, 0
        %v874 = vsel %vm463, %v831, 0
        %v877 = vsel %vm463, %v832, 0
        %v880 = vsel %vm463, %v833, 0
        %882 = vmatprep.subr.bf16.mxu0 0
        %883 = vmatpush1.bf16.msra.mxu0 %v850
        %884 = vmatprep.subr.bf16.mxu0 0
        %885 = vmatpush1.bf16.msra.mxu0 %v851
        %886 = vmatprep.subr.bf16.mxu0 0
        %887 = vmatpush1.bf16.msra.mxu0 %v852
        %888 = vmatprep.subr.bf16.mxu0 0
        %889 = vmatpush1.bf16.msra.mxu0 %v853
        %890 = vmatprep.subr.bf16.mxu0 0
        %891 = vmatpush1.bf16.msra.mxu0 0
        %892 = vmatprep.subr.bf16.mxu0 0
        %893 = vmatpush1.bf16.msra.mxu0 0
        %894 = vmatprep.subr.bf16.mxu0 0
        %895 = vmatpush1.bf16.msra.mxu0 0
        %896 = vmatprep.subr.bf16.mxu0 0
        %897 = vmatpush1.bf16.msra.mxu0 0
        %898 = vmatprep.subr.bf16.mxu0 0
        %899 = vmatpush1.bf16.msra.mxu0 0
        %900 = vmatprep.subr.bf16.mxu0 0
        %901 = vmatpush1.bf16.msra.mxu0 0
        %902 = vmatprep.subr.bf16.mxu0 0
        %903 = vmatpush1.bf16.msra.mxu0 0
        %904 = vmatprep.subr.bf16.mxu0 0
        %905 = vmatpush1.bf16.msra.mxu0 0
        %906 = vmatprep.subr.bf16.mxu0 0
        %907 = vmatpush1.bf16.msra.mxu0 0
        %908 = vmatprep.subr.bf16.mxu0 0
        %909 = vmatpush1.bf16.msra.mxu0 0
        %910 = vmatprep.subr.bf16.mxu0 0
        %911 = vmatpush1.bf16.msra.mxu0 0
        %912 = vmatprep.subr.bf16.mxu0 0
        %913 = vmatpush1.bf16.msra.mxu0 0
        %914 = vmatprep.mubr.bf16.mxu0 0
        %915 = vmatmul.mubr.bf16.gmra.mrb[0].mxu0 %v859
        %v916 = vpop.f32.mrb[0].mxu0
        %v917 = vadd.f32 0.0, %v916
        %v918 = vpop.f32.mrb[0].mxu0
        %v919 = vpop.f32.mrb[0].mxu0
        %v920 = vadd.f32 0.0, %v919
        %v921 = vpop.f32.mrb[0].mxu0
        %922 = vmatprep.mubr.bf16.mxu0 0
        %923 = vmatmul.mubr.bf16.gmra.mrb[0].mxu0 %v862
        %v924 = vpop.f32.mrb[0].mxu0
        %v925 = vadd.f32 0.0, %v924
        %v926 = vpop.f32.mrb[0].mxu0
        %v927 = vpop.f32.mrb[0].mxu0
        %v928 = vadd.f32 0.0, %v927
        %v929 = vpop.f32.mrb[0].mxu0
        %930 = vmatprep.mubr.bf16.mxu0 0
        %931 = vmatmul.mubr.bf16.gmra.mrb[0].mxu0 %v865
        %v932 = vpop.f32.mrb[0].mxu0
        %v933 = vadd.f32 0.0, %v932
        %v934 = vpop.f32.mrb[0].mxu0
        %v935 = vpop.f32.mrb[0].mxu0
        %v936 = vadd.f32 0.0, %v935
        %v937 = vpop.f32.mrb[0].mxu0
        %938 = vmatprep.mubr.bf16.mxu0 0
        %939 = vmatmul.mubr.bf16.gmra.mrb[0].mxu0 %v868
        %v940 = vpop.f32.mrb[0].mxu0
        %v941 = vadd.f32 0.0, %v940
        %v942 = vpop.f32.mrb[0].mxu0
        %v943 = vpop.f32.mrb[0].mxu0
        %v944 = vadd.f32 0.0, %v943
        %v945 = vpop.f32.mrb[0].mxu0
        %946 = vmatprep.mubr.bf16.mxu0 0
        %947 = vmatmul.mubr.bf16.gmra.mrb[0].mxu0 %v871
        %v948 = vpop.f32.mrb[0].mxu0
        %v949 = vadd.f32 0.0, %v948
        %v950 = vpop.f32.mrb[0].mxu0
        %v951 = vpop.f32.mrb[0].mxu0
        %v952 = vadd.f32 0.0, %v951
        %v953 = vpop.f32.mrb[0].mxu0
        %954 = vmatprep.mubr.bf16.mxu0 0
        %955 = vmatmul.mubr.bf16.gmra.mrb[0].mxu0 %v874
        %v956 = vpop.f32.mrb[0].mxu0
        %v957 = vadd.f32 0.0, %v956
        %v958 = vpop.f32.mrb[0].mxu0
        %v959 = vpop.f32.mrb[0].mxu0
        %v960 = vadd.f32 0.0, %v959
        %v961 = vpop.f32.mrb[0].mxu0
        %962 = vmatprep.mubr.bf16.mxu0 0
        %963 = vmatmul.mubr.bf16.gmra.mrb[0].mxu0 %v877
        %v964 = vpop.f32.mrb[0].mxu0
        %v965 = vadd.f32 0.0, %v964
        %v966 = vpop.f32.mrb[0].mxu0
        %v967 = vpop.f32.mrb[0].mxu0
        %v968 = vadd.f32 0.0, %v967
        %v969 = vpop.f32.mrb[0].mxu0
        %970 = vmatprep.mubr.bf16.mxu0 0
        %971 = vmatmul.mubr.bf16.gmra.mrb[0].mxu0 %v880
        %v972 = vpop.f32.mrb[0].mxu0
        %v973 = vadd.f32 0.0, %v972
        %v974 = vpop.f32.mrb[0].mxu0
        %v975 = vpop.f32.mrb[0].mxu0
        %v976 = vadd.f32 0.0, %v975
        %v977 = vpop.f32.mrb[0].mxu0
        %978 = vdwg.mxu0
        %v979 = vadd.f32 %v708, %v917
        %v980 = vadd.f32 %v711, %v920
        %v981 = vadd.f32 %v716, %v925
        %v982 = vadd.f32 %v719, %v928
        %v983 = vadd.f32 %v724, %v933
        %v984 = vadd.f32 %v727, %v936
        %v985 = vadd.f32 %v732, %v941
        %v986 = vadd.f32 %v735, %v944
        %v987 = vadd.f32 %v740, %v949
        %v988 = vadd.f32 %v743, %v952
        %v989 = vadd.f32 %v748, %v957
        %v990 = vadd.f32 %v751, %v960
        %v991 = vadd.f32 %v756, %v965
        %v992 = vadd.f32 %v759, %v968
        %v993 = vadd.f32 %v764, %v973
        %v994 = vadd.f32 %v767, %v976
        %v995 = vld [vmem:[%s6] sm:$0x1]
        %v997 = vlaneseq
        %v998 = vshrl.u32 %v997, 7
        %v999 = vsub.s32 0, %v998
        %v1000 = vrot.slane %v995, %v999
        %v1002 = vadd.f32 %v979, %v1000
        %v1003 = vadd.f32 %v980, %v1000
        %v1004 = vadd.f32 %v981, %v1000
        %v1005 = vadd.f32 %v982, %v1000
        %v1006 = vadd.f32 %v983, %v1000
        %v1007 = vadd.f32 %v984, %v1000
        %v1008 = vadd.f32 %v985, %v1000
        %v1009 = vadd.f32 %v986, %v1000
        %v1010 = vadd.f32 %v987, %v1000
        %v1011 = vadd.f32 %v988, %v1000
        %v1012 = vadd.f32 %v989, %v1000
        %v1013 = vadd.f32 %v990, %v1000
        %v1014 = vadd.f32 %v991, %v1000
        %v1015 = vadd.f32 %v992, %v1000
        %v1016 = vadd.f32 %v993, %v1000
        %v1017 = vadd.f32 %v994, %v1000
        %v1018 = vtanh.pop %v1002
        %v1019 = vtanh.pop %v1003
        %v1020 = vtanh.pop %v1004
        %v1021 = vtanh.pop %v1005
        %v1022 = vtanh.pop %v1006
        %v1023 = vtanh.pop %v1007
        %v1024 = vtanh.pop %v1008
        %v1025 = vtanh.pop %v1009
        %v1026 = vtanh.pop %v1010
        %v1027 = vtanh.pop %v1011
        %v1028 = vtanh.pop %v1012
        %v1029 = vtanh.pop %v1013
        %v1030 = vtanh.pop %v1014
        %v1031 = vtanh.pop %v1015
        %v1032 = vtanh.pop %v1016
        %v1033 = vtanh.pop %v1017
        %v1034 = vld [vmem:[%s7] sm:$0x1]
        %v1036 = vlaneseq
        %v1037 = vshrl.u32 %v1036, 7
        %v1038 = vsub.s32 0, %v1037
        %v1039 = vrot.slane %v1034, %v1038
        %v1041 = vmul.f32 %v1018, %v1039
        %v1042 = vmul.f32 %v1019, %v1039
        %v1043 = vmul.f32 %v1020, %v1039
        %v1044 = vmul.f32 %v1021, %v1039
        %v1045 = vmul.f32 %v1022, %v1039
        %v1046 = vmul.f32 %v1023, %v1039
        %v1047 = vmul.f32 %v1024, %v1039
        %v1048 = vmul.f32 %v1025, %v1039
        %v1049 = vmul.f32 %v1026, %v1039
        %v1050 = vmul.f32 %v1027, %v1039
        %v1051 = vmul.f32 %v1028, %v1039
        %v1052 = vmul.f32 %v1029, %v1039
        %v1053 = vmul.f32 %v1030, %v1039
        %v1054 = vmul.f32 %v1031, %v1039
        %v1055 = vmul.f32 %v1032, %v1039
        %v1056 = vmul.f32 %v1033, %v1039
        %v1057 = vsel %vm463, %v1041, 0.0
        %1058 = vadd.xlane.f32.xlu0 %v1057
        %v1059 = vpop.xlane.xlu0 %1058
        %v1060 = vsel %vm463, %v1042, 0.0
        %1061 = vadd.xlane.f32.xlu0 %v1060
        %v1062 = vpop.xlane.xlu0 %1061
        %v1063 = vsel %vm463, %v1043, 0.0
        %1064 = vadd.xlane.f32.xlu0 %v1063
        %v1065 = vpop.xlane.xlu0 %1064
        %v1066 = vsel %vm463, %v1044, 0.0
        %1067 = vadd.xlane.f32.xlu0 %v1066
        %v1068 = vpop.xlane.xlu0 %1067
        %v1069 = vsel %vm463, %v1045, 0.0
        %1070 = vadd.xlane.f32.xlu0 %v1069
        %v1071 = vpop.xlane.xlu0 %1070
        %v1072 = vsel %vm463, %v1046, 0.0
        %1073 = vadd.xlane.f32.xlu0 %v1072
        %v1074 = vpop.xlane.xlu0 %1073
        %v1075 = vsel %vm463, %v1047, 0.0
        %1076 = vadd.xlane.f32.xlu0 %v1075
        %v1077 = vpop.xlane.xlu0 %1076
        %v1078 = vsel %vm463, %v1048, 0.0
        %1079 = vadd.xlane.f32.xlu0 %v1078
        %v1080 = vpop.xlane.xlu0 %1079
        %v1081 = vsel %vm463, %v1049, 0.0
        %1082 = vadd.xlane.f32.xlu0 %v1081
        %v1083 = vpop.xlane.xlu0 %1082
        %v1084 = vsel %vm463, %v1050, 0.0
        %1085 = vadd.xlane.f32.xlu0 %v1084
        %v1086 = vpop.xlane.xlu0 %1085
        %v1087 = vsel %vm463, %v1051, 0.0
        %1088 = vadd.xlane.f32.xlu0 %v1087
        %v1089 = vpop.xlane.xlu0 %1088
        %v1090 = vsel %vm463, %v1052, 0.0
        %1091 = vadd.xlane.f32.xlu0 %v1090
        %v1092 = vpop.xlane.xlu0 %1091
        %v1093 = vsel %vm463, %v1053, 0.0
        %1094 = vadd.xlane.f32.xlu0 %v1093
        %v1095 = vpop.xlane.xlu0 %1094
        %v1096 = vsel %vm463, %v1054, 0.0
        %1097 = vadd.xlane.f32.xlu0 %v1096
        %v1098 = vpop.xlane.xlu0 %1097
        %v1099 = vsel %vm463, %v1055, 0.0
        %1100 = vadd.xlane.f32.xlu0 %v1099
        %v1101 = vpop.xlane.xlu0 %1100
        %v1102 = vsel %vm463, %v1056, 0.0
        %1103 = vadd.xlane.f32.xlu0 %v1102
        %v1104 = vpop.xlane.xlu0 %1103
        %v1121 = vlaneseq
        %v1122 = vand.u32 %v1121, 127
        %v1123 = vlaneseq
        %v1124 = vshrl.u32 %v1123, 7
        %v1125 = vsub.s32 %v1122, %v1124
        %v1126 = vrot.slane %v1059, %v1125
        %v1127 = vadd.s32 %v1122, 4294967288
        %v1128 = vlaneseq
        %v1129 = vshrl.u32 %v1128, 7
        %v1130 = vsub.s32 %v1127, %v1129
        %v1131 = vrot.slane %v1062, %v1130
        %vm1132 = vcmask 130112
        %v1133 = vsel %vm1132, %v1131, %v1126
        %v1134 = vlaneseq
        %v1135 = vshrl.u32 %v1134, 7
        %v1136 = vsub.s32 %v1122, %v1135
        %v1137 = vrot.slane %v1065, %v1136
        %v1138 = vlaneseq
        %v1139 = vshrl.u32 %v1138, 7
        %v1140 = vsub.s32 %v1127, %v1139
        %v1141 = vrot.slane %v1068, %v1140
        %v1142 = vsel %vm1132, %v1141, %v1137
        %v1143 = vlaneseq
        %v1144 = vshrl.u32 %v1143, 7
        %v1145 = vsub.s32 %v1122, %v1144
        %v1146 = vrot.slane %v1071, %v1145
        %v1147 = vlaneseq
        %v1148 = vshrl.u32 %v1147, 7
        %v1149 = vsub.s32 %v1127, %v1148
        %v1150 = vrot.slane %v1074, %v1149
        %v1151 = vsel %vm1132, %v1150, %v1146
        %v1152 = vlaneseq
        %v1153 = vshrl.u32 %v1152, 7
        %v1154 = vsub.s32 %v1122, %v1153
        %v1155 = vrot.slane %v1077, %v1154
        %v1156 = vlaneseq
        %v1157 = vshrl.u32 %v1156, 7
        %v1158 = vsub.s32 %v1127, %v1157
        %v1159 = vrot.slane %v1080, %v1158
        %v1160 = vsel %vm1132, %v1159, %v1155
        %v1161 = vlaneseq
        %v1162 = vshrl.u32 %v1161, 7
        %v1163 = vsub.s32 %v1122, %v1162
        %v1164 = vrot.slane %v1083, %v1163
        %v1165 = vlaneseq
        %v1166 = vshrl.u32 %v1165, 7
        %v1167 = vsub.s32 %v1127, %v1166
        %v1168 = vrot.slane %v1086, %v1167
        %v1169 = vsel %vm1132, %v1168, %v1164
        %v1170 = vlaneseq
        %v1171 = vshrl.u32 %v1170, 7
        %v1172 = vsub.s32 %v1122, %v1171
        %v1173 = vrot.slane %v1089, %v1172
        %v1174 = vlaneseq
        %v1175 = vshrl.u32 %v1174, 7
        %v1176 = vsub.s32 %v1127, %v1175
        %v1177 = vrot.slane %v1092, %v1176
        %v1178 = vsel %vm1132, %v1177, %v1173
        %v1179 = vlaneseq
        %v1180 = vshrl.u32 %v1179, 7
        %v1181 = vsub.s32 %v1122, %v1180
        %v1182 = vrot.slane %v1095, %v1181
        %v1183 = vlaneseq
        %v1184 = vshrl.u32 %v1183, 7
        %v1185 = vsub.s32 %v1127, %v1184
        %v1186 = vrot.slane %v1098, %v1185
        %v1187 = vsel %vm1132, %v1186, %v1182
        %v1188 = vlaneseq
        %v1189 = vshrl.u32 %v1188, 7
        %v1190 = vsub.s32 %v1122, %v1189
        %v1191 = vrot.slane %v1101, %v1190
        %v1192 = vlaneseq
        %v1193 = vshrl.u32 %v1192, 7
        %v1194 = vsub.s32 %v1127, %v1193
        %v1195 = vrot.slane %v1104, %v1194
        %v1196 = vsel %vm1132, %v1195, %v1191
        %vm1197 = vcmask 1041409
        %v1198 = vsel %vm1197, %v1142, %v1133
        %vm1199 = vcmask 1042434
        %v1200 = vsel %vm1199, %v1151, %v1198
        %vm1201 = vcmask 1043459
        %v1202 = vsel %vm1201, %v1160, %v1200
        %vm1203 = vcmask 1044484
        %v1204 = vsel %vm1203, %v1169, %v1202
        %vm1205 = vcmask 1045509
        %v1206 = vsel %vm1205, %v1178, %v1204
        %vm1207 = vcmask 1046534
        %v1208 = vsel %vm1207, %v1187, %v1206
        %vm1209 = vcmask 1047559
        %v1210 = vsel %vm1209, %v1196, %v1208
        %vm1212 = vcmask 130048
        %v1213 = vsel %vm1212, %v1210, -inf
        %1214 = vmax.xlane.f32.xlu0 %v1213
        %v1215 = vpop.xlane.xlu0 %1214
        %v1217 = vlaneseq
        %v1218 = vshrl.u32 %v1217, 7
        %v1219 = vsub.s32 0, %v1218
        %v1220 = vrot.slane %v1215, %v1219
        %v1221 = vlaneseq
        %v1222 = vshrl.u32 %v1221, 7
        %v1223 = vsub.s32 1, %v1222
        %v1224 = vrot.slane %v1215, %v1223
        %v1225 = vlaneseq
        %v1226 = vshrl.u32 %v1225, 7
        %v1227 = vsub.s32 2, %v1226
        %v1228 = vrot.slane %v1215, %v1227
        %v1229 = vlaneseq
        %v1230 = vshrl.u32 %v1229, 7
        %v1231 = vsub.s32 3, %v1230
        %v1232 = vrot.slane %v1215, %v1231
        %v1233 = vlaneseq
        %v1234 = vshrl.u32 %v1233, 7
        %v1235 = vsub.s32 4, %v1234
        %v1236 = vrot.slane %v1215, %v1235
        %v1237 = vlaneseq
        %v1238 = vshrl.u32 %v1237, 7
        %v1239 = vsub.s32 5, %v1238
        %v1240 = vrot.slane %v1215, %v1239
        %v1241 = vlaneseq
        %v1242 = vshrl.u32 %v1241, 7
        %v1243 = vsub.s32 6, %v1242
        %v1244 = vrot.slane %v1215, %v1243
        %v1245 = vlaneseq
        %v1246 = vshrl.u32 %v1245, 7
        %v1247 = vsub.s32 7, %v1246
        %v1248 = vrot.slane %v1215, %v1247
        %v1257 = vsub.f32 %v1059, %v1220
        %v1258 = vsub.f32 %v1062, %v1220
        %v1259 = vsub.f32 %v1065, %v1224
        %v1260 = vsub.f32 %v1068, %v1224
        %v1261 = vsub.f32 %v1071, %v1228
        %v1262 = vsub.f32 %v1074, %v1228
        %v1263 = vsub.f32 %v1077, %v1232
        %v1264 = vsub.f32 %v1080, %v1232
        %v1265 = vsub.f32 %v1083, %v1236
        %v1266 = vsub.f32 %v1086, %v1236
        %v1267 = vsub.f32 %v1089, %v1240
        %v1268 = vsub.f32 %v1092, %v1240
        %v1269 = vsub.f32 %v1095, %v1244
        %v1270 = vsub.f32 %v1098, %v1244
        %v1271 = vsub.f32 %v1101, %v1248
        %v1272 = vsub.f32 %v1104, %v1248
        %v1273 = vmul.f32 %v1257, 1.442695
        %v1274 = vpow.pop %v1273
        %v1275 = vmul.f32 %v1258, 1.442695
        %v1276 = vpow.pop %v1275
        %v1277 = vmul.f32 %v1259, 1.442695
        %v1278 = vpow.pop %v1277
        %v1279 = vmul.f32 %v1260, 1.442695
        %v1280 = vpow.pop %v1279
        %v1281 = vmul.f32 %v1261, 1.442695
        %v1282 = vpow.pop %v1281
        %v1283 = vmul.f32 %v1262, 1.442695
        %v1284 = vpow.pop %v1283
        %v1285 = vmul.f32 %v1263, 1.442695
        %v1286 = vpow.pop %v1285
        %v1287 = vmul.f32 %v1264, 1.442695
        %v1288 = vpow.pop %v1287
        %v1289 = vmul.f32 %v1265, 1.442695
        %v1290 = vpow.pop %v1289
        %v1291 = vmul.f32 %v1266, 1.442695
        %v1292 = vpow.pop %v1291
        %v1293 = vmul.f32 %v1267, 1.442695
        %v1294 = vpow.pop %v1293
        %v1295 = vmul.f32 %v1268, 1.442695
        %v1296 = vpow.pop %v1295
        %v1297 = vmul.f32 %v1269, 1.442695
        %v1298 = vpow.pop %v1297
        %v1299 = vmul.f32 %v1270, 1.442695
        %v1300 = vpow.pop %v1299
        %v1301 = vmul.f32 %v1271, 1.442695
        %v1302 = vpow.pop %v1301
        %v1303 = vmul.f32 %v1272, 1.442695
        %v1304 = vpow.pop %v1303
        %1321 = vset.pattern.permute.xlu0 0
        %1322 = vperm.xlu0 %1321, %v1274
        %v1323 = vpop.permute.xlu0 %1322
        %1324 = vset.pattern.permute.xlu0 0
        %1325 = vperm.xlu0 %1324, %v1276
        %v1326 = vpop.permute.xlu0 %1325
        %1327 = vset.pattern.permute.xlu0 0
        %1328 = vperm.xlu0 %1327, %v1278
        %v1329 = vpop.permute.xlu0 %1328
        %1330 = vset.pattern.permute.xlu0 0
        %1331 = vperm.xlu0 %1330, %v1280
        %v1332 = vpop.permute.xlu0 %1331
        %1333 = vset.pattern.permute.xlu0 0
        %1334 = vperm.xlu0 %1333, %v1282
        %v1335 = vpop.permute.xlu0 %1334
        %1336 = vset.pattern.permute.xlu0 0
        %1337 = vperm.xlu0 %1336, %v1284
        %v1338 = vpop.permute.xlu0 %1337
        %1339 = vset.pattern.permute.xlu0 0
        %1340 = vperm.xlu0 %1339, %v1286
        %v1341 = vpop.permute.xlu0 %1340
        %1342 = vset.pattern.permute.xlu0 0
        %1343 = vperm.xlu0 %1342, %v1288
        %v1344 = vpop.permute.xlu0 %1343
        %1345 = vset.pattern.permute.xlu0 0
        %1346 = vperm.xlu0 %1345, %v1290
        %v1347 = vpop.permute.xlu0 %1346
        %1348 = vset.pattern.permute.xlu0 0
        %1349 = vperm.xlu0 %1348, %v1292
        %v1350 = vpop.permute.xlu0 %1349
        %1351 = vset.pattern.permute.xlu0 0
        %1352 = vperm.xlu0 %1351, %v1294
        %v1353 = vpop.permute.xlu0 %1352
        %1354 = vset.pattern.permute.xlu0 0
        %1355 = vperm.xlu0 %1354, %v1296
        %v1356 = vpop.permute.xlu0 %1355
        %1357 = vset.pattern.permute.xlu0 0
        %1358 = vperm.xlu0 %1357, %v1298
        %v1359 = vpop.permute.xlu0 %1358
        %1360 = vset.pattern.permute.xlu0 0
        %1361 = vperm.xlu0 %1360, %v1300
        %v1362 = vpop.permute.xlu0 %1361
        %1363 = vset.pattern.permute.xlu0 0
        %1364 = vperm.xlu0 %1363, %v1302
        %v1365 = vpop.permute.xlu0 %1364
        %1366 = vset.pattern.permute.xlu0 0
        %1367 = vperm.xlu0 %1366, %v1304
        %v1368 = vpop.permute.xlu0 %1367
        %v1369 = vlaneseq
        %v1370 = vshrl.u32 %v1369, 7
        %v1371 = vsub.s32 %v1122, %v1370
        %v1372 = vrot.slane %v1323, %v1371
        %v1373 = vlaneseq
        %v1374 = vshrl.u32 %v1373, 7
        %v1375 = vsub.s32 %v1127, %v1374
        %v1376 = vrot.slane %v1326, %v1375
        %v1377 = vsel %vm1132, %v1376, %v1372
        %v1378 = vlaneseq
        %v1379 = vshrl.u32 %v1378, 7
        %v1380 = vsub.s32 %v1122, %v1379
        %v1381 = vrot.slane %v1329, %v1380
        %v1382 = vlaneseq
        %v1383 = vshrl.u32 %v1382, 7
        %v1384 = vsub.s32 %v1127, %v1383
        %v1385 = vrot.slane %v1332, %v1384
        %v1386 = vsel %vm1132, %v1385, %v1381
        %v1387 = vlaneseq
        %v1388 = vshrl.u32 %v1387, 7
        %v1389 = vsub.s32 %v1122, %v1388
        %v1390 = vrot.slane %v1335, %v1389
        %v1391 = vlaneseq
        %v1392 = vshrl.u32 %v1391, 7
        %v1393 = vsub.s32 %v1127, %v1392
        %v1394 = vrot.slane %v1338, %v1393
        %v1395 = vsel %vm1132, %v1394, %v1390
        %v1396 = vlaneseq
        %v1397 = vshrl.u32 %v1396, 7
        %v1398 = vsub.s32 %v1122, %v1397
        %v1399 = vrot.slane %v1341, %v1398
        %v1400 = vlaneseq
        %v1401 = vshrl.u32 %v1400, 7
        %v1402 = vsub.s32 %v1127, %v1401
        %v1403 = vrot.slane %v1344, %v1402
        %v1404 = vsel %vm1132, %v1403, %v1399
        %v1405 = vlaneseq
        %v1406 = vshrl.u32 %v1405, 7
        %v1407 = vsub.s32 %v1122, %v1406
        %v1408 = vrot.slane %v1347, %v1407
        %v1409 = vlaneseq
        %v1410 = vshrl.u32 %v1409, 7
        %v1411 = vsub.s32 %v1127, %v1410
        %v1412 = vrot.slane %v1350, %v1411
        %v1413 = vsel %vm1132, %v1412, %v1408
        %v1414 = vlaneseq
        %v1415 = vshrl.u32 %v1414, 7
        %v1416 = vsub.s32 %v1122, %v1415
        %v1417 = vrot.slane %v1353, %v1416
        %v1418 = vlaneseq
        %v1419 = vshrl.u32 %v1418, 7
        %v1420 = vsub.s32 %v1127, %v1419
        %v1421 = vrot.slane %v1356, %v1420
        %v1422 = vsel %vm1132, %v1421, %v1417
        %v1423 = vlaneseq
        %v1424 = vshrl.u32 %v1423, 7
        %v1425 = vsub.s32 %v1122, %v1424
        %v1426 = vrot.slane %v1359, %v1425
        %v1427 = vlaneseq
        %v1428 = vshrl.u32 %v1427, 7
        %v1429 = vsub.s32 %v1127, %v1428
        %v1430 = vrot.slane %v1362, %v1429
        %v1431 = vsel %vm1132, %v1430, %v1426
        %v1432 = vlaneseq
        %v1433 = vshrl.u32 %v1432, 7
        %v1434 = vsub.s32 %v1122, %v1433
        %v1435 = vrot.slane %v1365, %v1434
        %v1436 = vlaneseq
        %v1437 = vshrl.u32 %v1436, 7
        %v1438 = vsub.s32 %v1127, %v1437
        %v1439 = vrot.slane %v1368, %v1438
        %v1440 = vsel %vm1132, %v1439, %v1435
        %v1441 = vsel %vm1197, %v1386, %v1377
        %v1442 = vsel %vm1199, %v1395, %v1441
        %v1443 = vsel %vm1201, %v1404, %v1442
        %v1444 = vsel %vm1203, %v1413, %v1443
        %v1445 = vsel %vm1205, %v1422, %v1444
        %v1446 = vsel %vm1207, %v1431, %v1445
        %v1447 = vsel %vm1209, %v1440, %v1446
        %v1449 = vsel %vm1212, %v1447, 0.0
        %1450 = vadd.xlane.f32.xlu0 %v1449
        %v1451 = vpop.xlane.xlu0 %1450
        %v1452 = vrcp.pop %v1451
        %v1454 = vlaneseq
        %v1455 = vshrl.u32 %v1454, 7
        %v1456 = vsub.s32 0, %v1455
        %v1457 = vrot.slane %v1452, %v1456
        %v1458 = vlaneseq
        %v1459 = vshrl.u32 %v1458, 7
        %v1460 = vsub.s32 1, %v1459
        %v1461 = vrot.slane %v1452, %v1460
        %v1462 = vlaneseq
        %v1463 = vshrl.u32 %v1462, 7
        %v1464 = vsub.s32 2, %v1463
        %v1465 = vrot.slane %v1452, %v1464
        %v1466 = vlaneseq
        %v1467 = vshrl.u32 %v1466, 7
        %v1468 = vsub.s32 3, %v1467
        %v1469 = vrot.slane %v1452, %v1468
        %v1470 = vlaneseq
        %v1471 = vshrl.u32 %v1470, 7
        %v1472 = vsub.s32 4, %v1471
        %v1473 = vrot.slane %v1452, %v1472
        %v1474 = vlaneseq
        %v1475 = vshrl.u32 %v1474, 7
        %v1476 = vsub.s32 5, %v1475
        %v1477 = vrot.slane %v1452, %v1476
        %v1478 = vlaneseq
        %v1479 = vshrl.u32 %v1478, 7
        %v1480 = vsub.s32 6, %v1479
        %v1481 = vrot.slane %v1452, %v1480
        %v1482 = vlaneseq
        %v1483 = vshrl.u32 %v1482, 7
        %v1484 = vsub.s32 7, %v1483
        %v1485 = vrot.slane %v1452, %v1484
        %v1494 = vmul.f32 %v1274, %v1457
        %v1495 = vmul.f32 %v1276, %v1457
        %v1496 = vmul.f32 %v1278, %v1461
        %v1497 = vmul.f32 %v1280, %v1461
        %v1498 = vmul.f32 %v1282, %v1465
        %v1499 = vmul.f32 %v1284, %v1465
        %v1500 = vmul.f32 %v1286, %v1469
        %v1501 = vmul.f32 %v1288, %v1469
        %v1502 = vmul.f32 %v1290, %v1473
        %v1503 = vmul.f32 %v1292, %v1473
        %v1504 = vmul.f32 %v1294, %v1477
        %v1505 = vmul.f32 %v1296, %v1477
        %v1506 = vmul.f32 %v1298, %v1481
        %v1507 = vmul.f32 %v1300, %v1481
        %v1508 = vmul.f32 %v1302, %v1485
        %v1509 = vmul.f32 %v1304, %v1485
        %v1510 = vpack.c.bf16 %v1495, %v1494
        %v1511 = vpack.c.bf16 %v1497, %v1496
        %v1512 = vpack.c.bf16 %v1499, %v1498
        %v1513 = vpack.c.bf16 %v1501, %v1500
        %v1514 = vpack.c.bf16 %v1503, %v1502
        %v1515 = vpack.c.bf16 %v1505, %v1504
        %v1516 = vpack.c.bf16 %v1507, %v1506
        %v1517 = vpack.c.bf16 %v1509, %v1508
        %v1518 = vpack.c.bf16 %v1019, %v1018
        %v1519 = vpack.c.bf16 %v1021, %v1020
        %v1520 = vpack.c.bf16 %v1023, %v1022
        %v1521 = vpack.c.bf16 %v1025, %v1024
        %v1522 = vpack.c.bf16 %v1027, %v1026
        %v1523 = vpack.c.bf16 %v1029, %v1028
        %v1524 = vpack.c.bf16 %v1031, %v1030
        %v1525 = vpack.c.bf16 %v1033, %v1032
        %v1527 = vunpack.c.l.b16 %v1510
        %v1528 = vunpack.c.h.b16 %v1510
        %1529 = vset.pattern.permute.xlu0 0
        %1530 = vperm.xlu0 %1529, %v1527
        %v1531 = vpop.permute.xlu0 %1530
        %1532 = vset.pattern.permute.xlu0 0
        %1533 = vperm.xlu0 %1532, %v1528
        %v1534 = vpop.permute.xlu0 %1533
        %v1535 = vlaneseq
        %v1536 = vshrl.u32 %v1535, 7
        %v1537 = vsub.s32 %v1122, %v1536
        %v1538 = vrot.slane %v1531, %v1537
        %v1539 = vlaneseq
        %v1540 = vshrl.u32 %v1539, 7
        %v1541 = vsub.s32 %v1127, %v1540
        %v1542 = vrot.slane %v1534, %v1541
        %v1543 = vsel %vm1132, %v1542, %v1538
        %v1544 = vpack.c.b16 %v1543, %v1543
        %v1546 = vsel %vm1212, %v1544, 0
        %1548 = vmatprep.subr.bf16.mxu0 0
        %1549 = vmatpush1.bf16.msra.mxu0 %v1518
        %1550 = vmatprep.subr.bf16.mxu0 0
        %1551 = vmatpush1.bf16.msra.mxu0 0
        %1552 = vmatprep.subr.bf16.mxu0 0
        %1553 = vmatpush1.bf16.msra.mxu0 0
        %1554 = vmatprep.subr.bf16.mxu0 0
        %1555 = vmatpush1.bf16.msra.mxu0 0
        %1556 = vmatprep.subr.bf16.mxu0 0
        %1557 = vmatpush1.bf16.msra.mxu0 0
        %1558 = vmatprep.subr.bf16.mxu0 0
        %1559 = vmatpush1.bf16.msra.mxu0 0
        %1560 = vmatprep.subr.bf16.mxu0 0
        %1561 = vmatpush1.bf16.msra.mxu0 0
        %1562 = vmatprep.subr.bf16.mxu0 0
        %1563 = vmatpush1.bf16.msra.mxu0 0
        %1564 = vmatprep.subr.bf16.mxu0 0
        %1565 = vmatpush1.bf16.msra.mxu0 0
        %1566 = vmatprep.subr.bf16.mxu0 0
        %1567 = vmatpush1.bf16.msra.mxu0 0
        %1568 = vmatprep.subr.bf16.mxu0 0
        %1569 = vmatpush1.bf16.msra.mxu0 0
        %1570 = vmatprep.subr.bf16.mxu0 0
        %1571 = vmatpush1.bf16.msra.mxu0 0
        %1572 = vmatprep.subr.bf16.mxu0 0
        %1573 = vmatpush1.bf16.msra.mxu0 0
        %1574 = vmatprep.subr.bf16.mxu0 0
        %1575 = vmatpush1.bf16.msra.mxu0 0
        %1576 = vmatprep.subr.bf16.mxu0 0
        %1577 = vmatpush1.bf16.msra.mxu0 0
        %1578 = vmatprep.subr.bf16.mxu0 0
        %1579 = vmatpush1.bf16.msra.mxu0 0
        %1580 = vmatprep.mubr.bf16.mxu0 0
        %1581 = vmatmul.mubr.bf16.gmra.mrb[0].mxu0 %v1546
        %v1582 = vpop.f32.mrb[0].mxu0
        %v1583 = vadd.f32 0.0, %v1582
        %v1584 = vpop.f32.mrb[0].mxu0
        %v1585 = vpop.f32.mrb[0].mxu0
        %v1586 = vpop.f32.mrb[0].mxu0
        %1587 = vdwg.mxu0
        %v1589 = vunpack.c.l.b16 %v1511
        %v1590 = vunpack.c.h.b16 %v1511
        %1591 = vset.pattern.permute.xlu0 0
        %1592 = vperm.xlu0 %1591, %v1589
        %v1593 = vpop.permute.xlu0 %1592
        %1594 = vset.pattern.permute.xlu0 0
        %1595 = vperm.xlu0 %1594, %v1590
        %v1596 = vpop.permute.xlu0 %1595
        %v1597 = vlaneseq
        %v1598 = vshrl.u32 %v1597, 7
        %v1599 = vsub.s32 %v1122, %v1598
        %v1600 = vrot.slane %v1593, %v1599
        %v1601 = vlaneseq
        %v1602 = vshrl.u32 %v1601, 7
        %v1603 = vsub.s32 %v1127, %v1602
        %v1604 = vrot.slane %v1596, %v1603
        %v1605 = vsel %vm1132, %v1604, %v1600
        %v1606 = vpack.c.b16 %v1605, %v1605
        %v1608 = vsel %vm1212, %v1606, 0
        %1610 = vmatprep.subr.bf16.mxu0 0
        %1611 = vmatpush1.bf16.msra.mxu0 %v1519
        %1612 = vmatprep.subr.bf16.mxu0 0
        %1613 = vmatpush1.bf16.msra.mxu0 0
        %1614 = vmatprep.subr.bf16.mxu0 0
        %1615 = vmatpush1.bf16.msra.mxu0 0
        %1616 = vmatprep.subr.bf16.mxu0 0
        %1617 = vmatpush1.bf16.msra.mxu0 0
        %1618 = vmatprep.subr.bf16.mxu0 0
        %1619 = vmatpush1.bf16.msra.mxu0 0
        %1620 = vmatprep.subr.bf16.mxu0 0
        %1621 = vmatpush1.bf16.msra.mxu0 0
        %1622 = vmatprep.subr.bf16.mxu0 0
        %1623 = vmatpush1.bf16.msra.mxu0 0
        %1624 = vmatprep.subr.bf16.mxu0 0
        %1625 = vmatpush1.bf16.msra.mxu0 0
        %1626 = vmatprep.subr.bf16.mxu0 0
        %1627 = vmatpush1.bf16.msra.mxu0 0
        %1628 = vmatprep.subr.bf16.mxu0 0
        %1629 = vmatpush1.bf16.msra.mxu0 0
        %1630 = vmatprep.subr.bf16.mxu0 0
        %1631 = vmatpush1.bf16.msra.mxu0 0
        %1632 = vmatprep.subr.bf16.mxu0 0
        %1633 = vmatpush1.bf16.msra.mxu0 0
        %1634 = vmatprep.subr.bf16.mxu0 0
        %1635 = vmatpush1.bf16.msra.mxu0 0
        %1636 = vmatprep.subr.bf16.mxu0 0
        %1637 = vmatpush1.bf16.msra.mxu0 0
        %1638 = vmatprep.subr.bf16.mxu0 0
        %1639 = vmatpush1.bf16.msra.mxu0 0
        %1640 = vmatprep.subr.bf16.mxu0 0
        %1641 = vmatpush1.bf16.msra.mxu0 0
        %1642 = vmatprep.mubr.bf16.mxu0 0
        %1643 = vmatmul.mubr.bf16.gmra.mrb[0].mxu0 %v1608
        %v1644 = vpop.f32.mrb[0].mxu0
        %v1645 = vadd.f32 0.0, %v1644
        %v1646 = vpop.f32.mrb[0].mxu0
        %v1647 = vpop.f32.mrb[0].mxu0
        %v1648 = vpop.f32.mrb[0].mxu0
        %1649 = vdwg.mxu0
        %v1651 = vunpack.c.l.b16 %v1512
        %v1652 = vunpack.c.h.b16 %v1512
        %1653 = vset.pattern.permute.xlu0 0
        %1654 = vperm.xlu0 %1653, %v1651
        %v1655 = vpop.permute.xlu0 %1654
        %1656 = vset.pattern.permute.xlu0 0
        %1657 = vperm.xlu0 %1656, %v1652
        %v1658 = vpop.permute.xlu0 %1657
        %v1659 = vlaneseq
        %v1660 = vshrl.u32 %v1659, 7
        %v1661 = vsub.s32 %v1122, %v1660
        %v1662 = vrot.slane %v1655, %v1661
        %v1663 = vlaneseq
        %v1664 = vshrl.u32 %v1663, 7
        %v1665 = vsub.s32 %v1127, %v1664
        %v1666 = vrot.slane %v1658, %v1665
        %v1667 = vsel %vm1132, %v1666, %v1662
        %v1668 = vpack.c.b16 %v1667, %v1667
        %v1670 = vsel %vm1212, %v1668, 0
        %1672 = vmatprep.subr.bf16.mxu0 0
        %1673 = vmatpush1.bf16.msra.mxu0 %v1520
        %1674 = vmatprep.subr.bf16.mxu0 0
        %1675 = vmatpush1.bf16.msra.mxu0 0
        %1676 = vmatprep.subr.bf16.mxu0 0
        %1677 = vmatpush1.bf16.msra.mxu0 0
        %1678 = vmatprep.subr.bf16.mxu0 0
        %1679 = vmatpush1.bf16.msra.mxu0 0
        %1680 = vmatprep.subr.bf16.mxu0 0
        %1681 = vmatpush1.bf16.msra.mxu0 0
        %1682 = vmatprep.subr.bf16.mxu0 0
        %1683 = vmatpush1.bf16.msra.mxu0 0
        %1684 = vmatprep.subr.bf16.mxu0 0
        %1685 = vmatpush1.bf16.msra.mxu0 0
        %1686 = vmatprep.subr.bf16.mxu0 0
        %1687 = vmatpush1.bf16.msra.mxu0 0
        %1688 = vmatprep.subr.bf16.mxu0 0
        %1689 = vmatpush1.bf16.msra.mxu0 0
        %1690 = vmatprep.subr.bf16.mxu0 0
        %1691 = vmatpush1.bf16.msra.mxu0 0
        %1692 = vmatprep.subr.bf16.mxu0 0
        %1693 = vmatpush1.bf16.msra.mxu0 0
        %1694 = vmatprep.subr.bf16.mxu0 0
        %1695 = vmatpush1.bf16.msra.mxu0 0
        %1696 = vmatprep.subr.bf16.mxu0 0
        %1697 = vmatpush1.bf16.msra.mxu0 0
        %1698 = vmatprep.subr.bf16.mxu0 0
        %1699 = vmatpush1.bf16.msra.mxu0 0
        %1700 = vmatprep.subr.bf16.mxu0 0
        %1701 = vmatpush1.bf16.msra.mxu0 0
        %1702 = vmatprep.subr.bf16.mxu0 0
        %1703 = vmatpush1.bf16.msra.mxu0 0
        %1704 = vmatprep.mubr.bf16.mxu0 0
        %1705 = vmatmul.mubr.bf16.gmra.mrb[0].mxu0 %v1670
        %v1706 = vpop.f32.mrb[0].mxu0
        %v1707 = vadd.f32 0.0, %v1706
        %v1708 = vpop.f32.mrb[0].mxu0
        %v1709 = vpop.f32.mrb[0].mxu0
        %v1710 = vpop.f32.mrb[0].mxu0
        %1711 = vdwg.mxu0
        %v1713 = vunpack.c.l.b16 %v1513
        %v1714 = vunpack.c.h.b16 %v1513
        %1715 = vset.pattern.permute.xlu0 0
        %1716 = vperm.xlu0 %1715, %v1713
        %v1717 = vpop.permute.xlu0 %1716
        %1718 = vset.pattern.permute.xlu0 0
        %1719 = vperm.xlu0 %1718, %v1714
        %v1720 = vpop.permute.xlu0 %1719
        %v1721 = vlaneseq
        %v1722 = vshrl.u32 %v1721, 7
        %v1723 = vsub.s32 %v1122, %v1722
        %v1724 = vrot.slane %v1717, %v1723
        %v1725 = vlaneseq
        %v1726 = vshrl.u32 %v1725, 7
        %v1727 = vsub.s32 %v1127, %v1726
        %v1728 = vrot.slane %v1720, %v1727
        %v1729 = vsel %vm1132, %v1728, %v1724
        %v1730 = vpack.c.b16 %v1729, %v1729
        %v1732 = vsel %vm1212, %v1730, 0
        %1734 = vmatprep.subr.bf16.mxu0 0
        %1735 = vmatpush1.bf16.msra.mxu0 %v1521
        %1736 = vmatprep.subr.bf16.mxu0 0
        %1737 = vmatpush1.bf16.msra.mxu0 0
        %1738 = vmatprep.subr.bf16.mxu0 0
        %1739 = vmatpush1.bf16.msra.mxu0 0
        %1740 = vmatprep.subr.bf16.mxu0 0
        %1741 = vmatpush1.bf16.msra.mxu0 0
        %1742 = vmatprep.subr.bf16.mxu0 0
        %1743 = vmatpush1.bf16.msra.mxu0 0
        %1744 = vmatprep.subr.bf16.mxu0 0
        %1745 = vmatpush1.bf16.msra.mxu0 0
        %1746 = vmatprep.subr.bf16.mxu0 0
        %1747 = vmatpush1.bf16.msra.mxu0 0
        %1748 = vmatprep.subr.bf16.mxu0 0
        %1749 = vmatpush1.bf16.msra.mxu0 0
        %1750 = vmatprep.subr.bf16.mxu0 0
        %1751 = vmatpush1.bf16.msra.mxu0 0
        %1752 = vmatprep.subr.bf16.mxu0 0
        %1753 = vmatpush1.bf16.msra.mxu0 0
        %1754 = vmatprep.subr.bf16.mxu0 0
        %1755 = vmatpush1.bf16.msra.mxu0 0
        %1756 = vmatprep.subr.bf16.mxu0 0
        %1757 = vmatpush1.bf16.msra.mxu0 0
        %1758 = vmatprep.subr.bf16.mxu0 0
        %1759 = vmatpush1.bf16.msra.mxu0 0
        %1760 = vmatprep.subr.bf16.mxu0 0
        %1761 = vmatpush1.bf16.msra.mxu0 0
        %1762 = vmatprep.subr.bf16.mxu0 0
        %1763 = vmatpush1.bf16.msra.mxu0 0
        %1764 = vmatprep.subr.bf16.mxu0 0
        %1765 = vmatpush1.bf16.msra.mxu0 0
        %1766 = vmatprep.mubr.bf16.mxu0 0
        %1767 = vmatmul.mubr.bf16.gmra.mrb[0].mxu0 %v1732
        %v1768 = vpop.f32.mrb[0].mxu0
        %v1769 = vadd.f32 0.0, %v1768
        %v1770 = vpop.f32.mrb[0].mxu0
        %v1771 = vpop.f32.mrb[0].mxu0
        %v1772 = vpop.f32.mrb[0].mxu0
        %1773 = vdwg.mxu0
        %v1775 = vunpack.c.l.b16 %v1514
        %v1776 = vunpack.c.h.b16 %v1514
        %1777 = vset.pattern.permute.xlu0 0
        %1778 = vperm.xlu0 %1777, %v1775
        %v1779 = vpop.permute.xlu0 %1778
        %1780 = vset.pattern.permute.xlu0 0
        %1781 = vperm.xlu0 %1780, %v1776
        %v1782 = vpop.permute.xlu0 %1781
        %v1783 = vlaneseq
        %v1784 = vshrl.u32 %v1783, 7
        %v1785 = vsub.s32 %v1122, %v1784
        %v1786 = vrot.slane %v1779, %v1785
        %v1787 = vlaneseq
        %v1788 = vshrl.u32 %v1787, 7
        %v1789 = vsub.s32 %v1127, %v1788
        %v1790 = vrot.slane %v1782, %v1789
        %v1791 = vsel %vm1132, %v1790, %v1786
        %v1792 = vpack.c.b16 %v1791, %v1791
        %v1794 = vsel %vm1212, %v1792, 0
        %1796 = vmatprep.subr.bf16.mxu0 0
        %1797 = vmatpush1.bf16.msra.mxu0 %v1522
        %1798 = vmatprep.subr.bf16.mxu0 0
        %1799 = vmatpush1.bf16.msra.mxu0 0
        %1800 = vmatprep.subr.bf16.mxu0 0
        %1801 = vmatpush1.bf16.msra.mxu0 0
        %1802 = vmatprep.subr.bf16.mxu0 0
        %1803 = vmatpush1.bf16.msra.mxu0 0
        %1804 = vmatprep.subr.bf16.mxu0 0
        %1805 = vmatpush1.bf16.msra.mxu0 0
        %1806 = vmatprep.subr.bf16.mxu0 0
        %1807 = vmatpush1.bf16.msra.mxu0 0
        %1808 = vmatprep.subr.bf16.mxu0 0
        %1809 = vmatpush1.bf16.msra.mxu0 0
        %1810 = vmatprep.subr.bf16.mxu0 0
        %1811 = vmatpush1.bf16.msra.mxu0 0
        %1812 = vmatprep.subr.bf16.mxu0 0
        %1813 = vmatpush1.bf16.msra.mxu0 0
        %1814 = vmatprep.subr.bf16.mxu0 0
        %1815 = vmatpush1.bf16.msra.mxu0 0
        %1816 = vmatprep.subr.bf16.mxu0 0
        %1817 = vmatpush1.bf16.msra.mxu0 0
        %1818 = vmatprep.subr.bf16.mxu0 0
        %1819 = vmatpush1.bf16.msra.mxu0 0
        %1820 = vmatprep.subr.bf16.mxu0 0
        %1821 = vmatpush1.bf16.msra.mxu0 0
        %1822 = vmatprep.subr.bf16.mxu0 0
        %1823 = vmatpush1.bf16.msra.mxu0 0
        %1824 = vmatprep.subr.bf16.mxu0 0
        %1825 = vmatpush1.bf16.msra.mxu0 0
        %1826 = vmatprep.subr.bf16.mxu0 0
        %1827 = vmatpush1.bf16.msra.mxu0 0
        %1828 = vmatprep.mubr.bf16.mxu0 0
        %1829 = vmatmul.mubr.bf16.gmra.mrb[0].mxu0 %v1794
        %v1830 = vpop.f32.mrb[0].mxu0
        %v1831 = vadd.f32 0.0, %v1830
        %v1832 = vpop.f32.mrb[0].mxu0
        %v1833 = vpop.f32.mrb[0].mxu0
        %v1834 = vpop.f32.mrb[0].mxu0
        %1835 = vdwg.mxu0
        %v1837 = vunpack.c.l.b16 %v1515
        %v1838 = vunpack.c.h.b16 %v1515
        %1839 = vset.pattern.permute.xlu0 0
        %1840 = vperm.xlu0 %1839, %v1837
        %v1841 = vpop.permute.xlu0 %1840
        %1842 = vset.pattern.permute.xlu0 0
        %1843 = vperm.xlu0 %1842, %v1838
        %v1844 = vpop.permute.xlu0 %1843
        %v1845 = vlaneseq
        %v1846 = vshrl.u32 %v1845, 7
        %v1847 = vsub.s32 %v1122, %v1846
        %v1848 = vrot.slane %v1841, %v1847
        %v1849 = vlaneseq
        %v1850 = vshrl.u32 %v1849, 7
        %v1851 = vsub.s32 %v1127, %v1850
        %v1852 = vrot.slane %v1844, %v1851
        %v1853 = vsel %vm1132, %v1852, %v1848
        %v1854 = vpack.c.b16 %v1853, %v1853
        %v1856 = vsel %vm1212, %v1854, 0
        %1858 = vmatprep.subr.bf16.mxu0 0
        %1859 = vmatpush1.bf16.msra.mxu0 %v1523
        %1860 = vmatprep.subr.bf16.mxu0 0
        %1861 = vmatpush1.bf16.msra.mxu0 0
        %1862 = vmatprep.subr.bf16.mxu0 0
        %1863 = vmatpush1.bf16.msra.mxu0 0
        %1864 = vmatprep.subr.bf16.mxu0 0
        %1865 = vmatpush1.bf16.msra.mxu0 0
        %1866 = vmatprep.subr.bf16.mxu0 0
        %1867 = vmatpush1.bf16.msra.mxu0 0
        %1868 = vmatprep.subr.bf16.mxu0 0
        %1869 = vmatpush1.bf16.msra.mxu0 0
        %1870 = vmatprep.subr.bf16.mxu0 0
        %1871 = vmatpush1.bf16.msra.mxu0 0
        %1872 = vmatprep.subr.bf16.mxu0 0
        %1873 = vmatpush1.bf16.msra.mxu0 0
        %1874 = vmatprep.subr.bf16.mxu0 0
        %1875 = vmatpush1.bf16.msra.mxu0 0
        %1876 = vmatprep.subr.bf16.mxu0 0
        %1877 = vmatpush1.bf16.msra.mxu0 0
        %1878 = vmatprep.subr.bf16.mxu0 0
        %1879 = vmatpush1.bf16.msra.mxu0 0
        %1880 = vmatprep.subr.bf16.mxu0 0
        %1881 = vmatpush1.bf16.msra.mxu0 0
        %1882 = vmatprep.subr.bf16.mxu0 0
        %1883 = vmatpush1.bf16.msra.mxu0 0
        %1884 = vmatprep.subr.bf16.mxu0 0
        %1885 = vmatpush1.bf16.msra.mxu0 0
        %1886 = vmatprep.subr.bf16.mxu0 0
        %1887 = vmatpush1.bf16.msra.mxu0 0
        %1888 = vmatprep.subr.bf16.mxu0 0
        %1889 = vmatpush1.bf16.msra.mxu0 0
        %1890 = vmatprep.mubr.bf16.mxu0 0
        %1891 = vmatmul.mubr.bf16.gmra.mrb[0].mxu0 %v1856
        %v1892 = vpop.f32.mrb[0].mxu0
        %v1893 = vadd.f32 0.0, %v1892
        %v1894 = vpop.f32.mrb[0].mxu0
        %v1895 = vpop.f32.mrb[0].mxu0
        %v1896 = vpop.f32.mrb[0].mxu0
        %1897 = vdwg.mxu0
        %v1899 = vunpack.c.l.b16 %v1516
        %v1900 = vunpack.c.h.b16 %v1516
        %1901 = vset.pattern.permute.xlu0 0
        %1902 = vperm.xlu0 %1901, %v1899
        %v1903 = vpop.permute.xlu0 %1902
        %1904 = vset.pattern.permute.xlu0 0
        %1905 = vperm.xlu0 %1904, %v1900
        %v1906 = vpop.permute.xlu0 %1905
        %v1907 = vlaneseq
        %v1908 = vshrl.u32 %v1907, 7
        %v1909 = vsub.s32 %v1122, %v1908
        %v1910 = vrot.slane %v1903, %v1909
        %v1911 = vlaneseq
        %v1912 = vshrl.u32 %v1911, 7
        %v1913 = vsub.s32 %v1127, %v1912
        %v1914 = vrot.slane %v1906, %v1913
        %v1915 = vsel %vm1132, %v1914, %v1910
        %v1916 = vpack.c.b16 %v1915, %v1915
        %v1918 = vsel %vm1212, %v1916, 0
        %1920 = vmatprep.subr.bf16.mxu0 0
        %1921 = vmatpush1.bf16.msra.mxu0 %v1524
        %1922 = vmatprep.subr.bf16.mxu0 0
        %1923 = vmatpush1.bf16.msra.mxu0 0
        %1924 = vmatprep.subr.bf16.mxu0 0
        %1925 = vmatpush1.bf16.msra.mxu0 0
        %1926 = vmatprep.subr.bf16.mxu0 0
        %1927 = vmatpush1.bf16.msra.mxu0 0
        %1928 = vmatprep.subr.bf16.mxu0 0
        %1929 = vmatpush1.bf16.msra.mxu0 0
        %1930 = vmatprep.subr.bf16.mxu0 0
        %1931 = vmatpush1.bf16.msra.mxu0 0
        %1932 = vmatprep.subr.bf16.mxu0 0
        %1933 = vmatpush1.bf16.msra.mxu0 0
        %1934 = vmatprep.subr.bf16.mxu0 0
        %1935 = vmatpush1.bf16.msra.mxu0 0
        %1936 = vmatprep.subr.bf16.mxu0 0
        %1937 = vmatpush1.bf16.msra.mxu0 0
        %1938 = vmatprep.subr.bf16.mxu0 0
        %1939 = vmatpush1.bf16.msra.mxu0 0
        %1940 = vmatprep.subr.bf16.mxu0 0
        %1941 = vmatpush1.bf16.msra.mxu0 0
        %1942 = vmatprep.subr.bf16.mxu0 0
        %1943 = vmatpush1.bf16.msra.mxu0 0
        %1944 = vmatprep.subr.bf16.mxu0 0
        %1945 = vmatpush1.bf16.msra.mxu0 0
        %1946 = vmatprep.subr.bf16.mxu0 0
        %1947 = vmatpush1.bf16.msra.mxu0 0
        %1948 = vmatprep.subr.bf16.mxu0 0
        %1949 = vmatpush1.bf16.msra.mxu0 0
        %1950 = vmatprep.subr.bf16.mxu0 0
        %1951 = vmatpush1.bf16.msra.mxu0 0
        %1952 = vmatprep.mubr.bf16.mxu0 0
        %1953 = vmatmul.mubr.bf16.gmra.mrb[0].mxu0 %v1918
        %v1954 = vpop.f32.mrb[0].mxu0
        %v1955 = vadd.f32 0.0, %v1954
        %v1956 = vpop.f32.mrb[0].mxu0
        %v1957 = vpop.f32.mrb[0].mxu0
        %v1958 = vpop.f32.mrb[0].mxu0
        %1959 = vdwg.mxu0
        %v1961 = vunpack.c.l.b16 %v1517
        %v1962 = vunpack.c.h.b16 %v1517
        %1963 = vset.pattern.permute.xlu0 0
        %1964 = vperm.xlu0 %1963, %v1961
        %v1965 = vpop.permute.xlu0 %1964
        %1966 = vset.pattern.permute.xlu0 0
        %1967 = vperm.xlu0 %1966, %v1962
        %v1968 = vpop.permute.xlu0 %1967
        %v1969 = vlaneseq
        %v1970 = vshrl.u32 %v1969, 7
        %v1971 = vsub.s32 %v1122, %v1970
        %v1972 = vrot.slane %v1965, %v1971
        %v1973 = vlaneseq
        %v1974 = vshrl.u32 %v1973, 7
        %v1975 = vsub.s32 %v1127, %v1974
        %v1976 = vrot.slane %v1968, %v1975
        %v1977 = vsel %vm1132, %v1976, %v1972
        %v1978 = vpack.c.b16 %v1977, %v1977
        %v1980 = vsel %vm1212, %v1978, 0
        %1982 = vmatprep.subr.bf16.mxu0 0
        %1983 = vmatpush1.bf16.msra.mxu0 %v1525
        %1984 = vmatprep.subr.bf16.mxu0 0
        %1985 = vmatpush1.bf16.msra.mxu0 0
        %1986 = vmatprep.subr.bf16.mxu0 0
        %1987 = vmatpush1.bf16.msra.mxu0 0
        %1988 = vmatprep.subr.bf16.mxu0 0
        %1989 = vmatpush1.bf16.msra.mxu0 0
        %1990 = vmatprep.subr.bf16.mxu0 0
        %1991 = vmatpush1.bf16.msra.mxu0 0
        %1992 = vmatprep.subr.bf16.mxu0 0
        %1993 = vmatpush1.bf16.msra.mxu0 0
        %1994 = vmatprep.subr.bf16.mxu0 0
        %1995 = vmatpush1.bf16.msra.mxu0 0
        %1996 = vmatprep.subr.bf16.mxu0 0
        %1997 = vmatpush1.bf16.msra.mxu0 0
        %1998 = vmatprep.subr.bf16.mxu0 0
        %1999 = vmatpush1.bf16.msra.mxu0 0
        %2000 = vmatprep.subr.bf16.mxu0 0
        %2001 = vmatpush1.bf16.msra.mxu0 0
        %2002 = vmatprep.subr.bf16.mxu0 0
        %2003 = vmatpush1.bf16.msra.mxu0 0
        %2004 = vmatprep.subr.bf16.mxu0 0
        %2005 = vmatpush1.bf16.msra.mxu0 0
        %2006 = vmatprep.subr.bf16.mxu0 0
        %2007 = vmatpush1.bf16.msra.mxu0 0
        %2008 = vmatprep.subr.bf16.mxu0 0
        %2009 = vmatpush1.bf16.msra.mxu0 0
        %2010 = vmatprep.subr.bf16.mxu0 0
        %2011 = vmatpush1.bf16.msra.mxu0 0
        %2012 = vmatprep.subr.bf16.mxu0 0
        %2013 = vmatpush1.bf16.msra.mxu0 0
        %2014 = vmatprep.mubr.bf16.mxu0 0
        %2015 = vmatmul.mubr.bf16.gmra.mrb[0].mxu0 %v1980
        %v2016 = vpop.f32.mrb[0].mxu0
        %v2017 = vadd.f32 0.0, %v2016
        %v2018 = vpop.f32.mrb[0].mxu0
        %v2019 = vpop.f32.mrb[0].mxu0
        %v2020 = vpop.f32.mrb[0].mxu0
        %2021 = vdwg.mxu0
        %v2030 = vrot.slane %v1645, 7
        %v2031 = vsel %vm1197, %v2030, %v1583
        %v2032 = vrot.slane %v1707, 6
        %v2033 = vsel %vm1199, %v2032, %v2031
        %v2034 = vrot.slane %v1769, 5
        %v2035 = vsel %vm1201, %v2034, %v2033
        %v2036 = vrot.slane %v1831, 4
        %v2037 = vsel %vm1203, %v2036, %v2035
        %v2038 = vrot.slane %v1893, 3
        %v2039 = vsel %vm1205, %v2038, %v2037
        %v2040 = vrot.slane %v1955, 2
        %v2041 = vsel %vm1207, %v2040, %v2039
        %v2042 = vrot.slane %v2017, 1
        %v2043 = vsel %vm1209, %v2042, %v2041
        %2045 = vst.msk [vmem:[%s331] sm:$0xff] %vm463, %v2043
        %s2046 = sand.u32 %s213, 1
        %s2047 = scalar_lea.sflag [#allocation3], %s2046
        %s2048 = sand.u32 %s213, 1
        %s2049 = smul.addr %s2048, 8
        %s2050 = scalar_lea.vmem [#allocation2], %s2049
        // Predicated region
        $region53: #{tpu_custom_call.1} parent=51 // pred_check
          %p2051 = pneg %p223
        $region54: #{tpu_custom_call.1} parent=51 // pred_check_branch
          %2053 = sbr.rel (%p2051) target = $region56
        $region55: #{tpu_custom_call.1} parent=51 // pred_region
          %s2055 = ssub.s32 128, 128
          %2056 = vsyncadd %s2047, %s2055
          %s2057 = smul.addr %s22, 128
          %s2058 = scalar_lea.hbm %s8, %s2057
          %s2060 = sshll.u32 %s2050, 4
          %s2061 = int_to_ptr.vmem [resolvable:$true] %s2060
          %2063 = dma.vmem_to_hbm [thread:$0]  %s2061, 128, %s2058, %s2047
        $region56: #{tpu_custom_call.1} parent=51 // pred_fallthru
          _
      $region52: #{tpu_custom_call.1} parent=5 // pred_fallthru
        _
      %p2064 = scmp.le.s32.totalorder 2, %s17
      // Predicated region
      $region57: #{tpu_custom_call.1} parent=5 // pred_check
        %p2065 = pneg %p2064
      $region58: #{tpu_custom_call.1} parent=5 // pred_check_branch
        %2067 = sbr.rel (%p2065) target = $region60
      $region59: #{tpu_custom_call.1} parent=5 // pred_region
        %s2068 = ssub.s32 %s17, 2
        // Predicated region
        $region61: #{tpu_custom_call.1} parent=59 // pred_check
          %p2069 = pneg %p229
        $region62: #{tpu_custom_call.1} parent=59 // pred_check_branch
          %2071 = sbr.rel (%p2069) target = $region64
        $region63: #{tpu_custom_call.1} parent=59 // pred_region
          %s2072 = sand.u32 %s214, 1
          %s2073 = scalar_lea.sflag [#allocation3], %s2072
          %s2074 = sand.u32 %s214, 1
          %s2075 = smul.addr %s2074, 8
          %s2076 = scalar_lea.vmem [#allocation2], %s2075
          %2077 = dma.done %s2073, 128
        $region64: #{tpu_custom_call.1} parent=59 // pred_fallthru
          _
      $region60: #{tpu_custom_call.1} parent=5 // pred_fallthru
        _
    $region6: #{tpu_custom_call.1} parent=1 // loop_footer
      %s21 = sadd.s32 1, %s17
    $region7: #{tpu_custom_call.1} parent=1 // loop_footer_branch
      %16 = sbr.rel target = $region3
    $region8: #{tpu_custom_call.1} parent=1 // loop_exit
      _
    %2078 = vsyncpa [#allocation3], 1
    %s2079 = scalar_lea.sflag [#allocation3], 1
    %2080 = vsyncpa %s2079, 1

</llo_original>
